<compile_context>
chip_gen: v5e
topology: v5e:2x2
jax: 0.10.0
libtpu: 0.0.40
codegen_flags: <defaults>
</compile_context>

<pallas_src>
import functools
import math

import jax
import jax.numpy as jnp
from jax.experimental import pallas as pl
from jax.experimental.pallas import tpu as pltpu


# Explicit scoped-VMEM budget: raises v5e's 16 MiB default, matches v6e/v7x default.
_COMPILER_PARAMS = pltpu.CompilerParams(vmem_limit_bytes=32 * 1024 * 1024)


# ----------------------------- Pallas kernels ------------------------------

def _pe_stem_kernel(pe_ref, s_ref, b_ref, w_ref, bias_ref, o_ref):
    # eval-mode BatchNorm1d(20) folded to scale/shift, fused with pe_lin.
    pe_n = pe_ref[...] * s_ref[...] + b_ref[...]
    o_ref[...] = (jnp.dot(pe_n, w_ref[...], preferred_element_type=jnp.float32)
                  + bias_ref[...])


def pallas_pe_stem(pe, scale, shift, w, b):
    n = pe.shape[0]
    d = w.shape[1]
    return pl.pallas_call(
        _pe_stem_kernel,
        out_shape=jax.ShapeDtypeStruct((n, d), jnp.float32),
        compiler_params=_COMPILER_PARAMS,
    )(pe, scale, shift, w, b)


def _gps_layer_kernel(x_ref, ea_ref, src_oh_ref, dst_oh_t_ref, bias_ref,
                      gw1_ref, gb1_ref, gw2_ref, gb2_ref, n1s_ref, n1b_ref,
                      wqkv_ref, bqkv_ref, wo_ref, bo_ref, n2s_ref, n2b_ref,
                      mw1_ref, mb1_ref, mw2_ref, mb2_ref, n3s_ref, n3b_ref,
                      o_ref, *, heads, dh, scale):
    f32 = jnp.float32
    x = x_ref[...]                                   # (N, C)
    n, c = x.shape

    # ---- local message passing: GINEConv(eps=0) + MLP + residual + BN1 ----
    msgs = jnp.maximum(
        jnp.dot(src_oh_ref[...], x, preferred_element_type=f32) + ea_ref[...], 0.0)
    agg = jnp.dot(dst_oh_t_ref[...], msgs, preferred_element_type=f32)      # (N, C)
    h = jnp.maximum(
        jnp.dot(agg + x, gw1_ref[...], preferred_element_type=f32) + gb1_ref[...],
        0.0)
    h = jnp.dot(h, gw2_ref[...], preferred_element_type=f32) + gb2_ref[...]
    h = (h + x) * n1s_ref[...] + n1b_ref[...]                               # BN1

    # ---- global multi-head attention ----
    # Block-diagonal attention over the sparse node layout with an additive
    # (N,N) bias is mathematically identical to PyG's to_dense_batch + MHA with
    # key-padding mask + h[mask] (padded rows/cols simply never exist here).
    qkv = jnp.dot(x, wqkv_ref[...], preferred_element_type=f32) + bqkv_ref[...]
    bias = bias_ref[...]
    wo = wo_ref[...]
    attn = jnp.zeros((n, c), f32)
    for hh in range(heads):                          # static unroll, tiny head count
        lo = hh * dh
        q_h = qkv[:, lo:lo + dh]
        k_h = qkv[:, c + lo:c + lo + dh]
        v_h = qkv[:, 2 * c + lo:2 * c + lo + dh]
        s = jnp.dot(q_h, k_h.T, preferred_element_type=f32) * scale + bias
        s = s - jnp.max(s, axis=-1, keepdims=True)
        p = jnp.exp(s)
        p = p * pl.reciprocal(jnp.sum(p, axis=-1, keepdims=True), approx=True)
        ctx_h = jnp.dot(p, v_h, preferred_element_type=f32)
        # out-projection folded per-head (avoids materializing the concat)
        attn = attn + jnp.dot(ctx_h, wo[lo:lo + dh, :], preferred_element_type=f32)
    h_attn = (attn + bo_ref[...] + x) * n2s_ref[...] + n2b_ref[...]         # BN2

    # ---- combine + feed-forward + BN3 ----
    out = h + h_attn
    m = jnp.maximum(
        jnp.dot(out, mw1_ref[...], preferred_element_type=f32) + mb1_ref[...], 0.0)
    m = jnp.dot(m, mw2_ref[...], preferred_element_type=f32) + mb2_ref[...]
    o_ref[...] = (out + m) * n3s_ref[...] + n3b_ref[...]                    # BN3


def pallas_gps_layer(lp, x, ea, src_oh, dst_oh_t, attn_bias, *, heads):
    n, c = x.shape
    dh = c // heads
    n1s, n1b = _bn_fold(lp["norm1"])
    n2s, n2b = _bn_fold(lp["norm2"])
    n3s, n3b = _bn_fold(lp["norm3"])
    return pl.pallas_call(
        functools.partial(_gps_layer_kernel, heads=heads, dh=dh,
                          scale=1.0 / math.sqrt(dh)),
        out_shape=jax.ShapeDtypeStruct((n, c), jnp.float32),
        compiler_params=_COMPILER_PARAMS,
    )(x, ea, src_oh, dst_oh_t, attn_bias,
      lp["gine_w1"], lp["gine_b1"].reshape(1, -1),
      lp["gine_w2"], lp["gine_b2"].reshape(1, -1), n1s, n1b,
      lp["w_qkv"], lp["b_qkv"].reshape(1, -1),
      lp["w_o"], lp["b_o"].reshape(1, -1), n2s, n2b,
      lp["mlp_w1"], lp["mlp_b1"].reshape(1, -1),
      lp["mlp_w2"], lp["mlp_b2"].reshape(1, -1), n3s, n3b)


def _head_kernel(pool_ref, h_ref, w1_ref, b1_ref, w2_ref, b2_ref, w3_ref, b3_ref,
                 o_ref):
    f32 = jnp.float32
    pooled = jnp.dot(pool_ref[...], h_ref[...], preferred_element_type=f32)  # (B, C)
    z = jnp.maximum(jnp.dot(pooled, w1_ref[...], preferred_element_type=f32)
                    + b1_ref[...], 0.0)
    z = jnp.maximum(jnp.dot(z, w2_ref[...], preferred_element_type=f32)
                    + b2_ref[...], 0.0)
    o_ref[...] = jnp.dot(z, w3_ref[...], preferred_element_type=f32) + b3_ref[...]


def pallas_head(pool_sel, h, params):
    b = pool_sel.shape[0]
    out_dim = params["head_w3"].shape[1]
    return pl.pallas_call(
        _head_kernel,
        out_shape=jax.ShapeDtypeStruct((b, out_dim), jnp.float32),
        compiler_params=_COMPILER_PARAMS,
    )(pool_sel, h,
      params["head_w1"], params["head_b1"].reshape(1, -1),
      params["head_w2"], params["head_b2"].reshape(1, -1),
      params["head_w3"], params["head_b3"].reshape(1, -1))


# ------------------------------- glue ops ----------------------------------

def _bn_fold(p):
    # eval-mode BatchNorm1d (eps=1e-5) folded into a per-channel scale/shift FMA.
    scale = p["gamma"] * jax.lax.rsqrt(p["var"] + 1e-5)
    shift = p["beta"] - p["mean"] * scale
    return scale.reshape(1, -1), shift.reshape(1, -1)


# --------------------------- parameter creation -----------------------------

def _init_linear(key, fan_in, fan_out):
    kw, kb = jax.random.split(key)
    bound = 1.0 / math.sqrt(fan_in)
    w = jax.random.uniform(kw, (fan_in, fan_out), jnp.float32, -bound, bound)
    b = jax.random.uniform(kb, (fan_out,), jnp.float32, -bound, bound)
    return w, b


def _init_bn(key, dim):
    k1, k2, k3, k4 = jax.random.split(key, 4)
    return {
        "gamma": jax.random.uniform(k1, (dim,), jnp.float32, 0.5, 1.5),
        "beta": 0.1 * jax.random.normal(k2, (dim,), jnp.float32),
        "mean": 0.1 * jax.random.normal(k3, (dim,), jnp.float32),
        "var": jax.random.uniform(k4, (dim,), jnp.float32, 0.5, 1.5),
    }


def init_gps_params(key, channels, pe_dim, num_layers):
    keys = iter(jax.random.split(key, 16 + 16 * num_layers))
    nk = lambda: next(keys)
    params = {}
    params["node_emb"] = jax.random.normal(nk(), (119, channels - pe_dim), jnp.float32)
    params["edge_emb"] = jax.random.normal(nk(), (22, channels), jnp.float32)
    params["pe_w"], params["pe_b"] = _init_linear(nk(), 20, pe_dim)
    params["pe_norm"] = _init_bn(nk(), 20)
    layers = []
    for _ in range(num_layers):
        lp = {}
        lp["gine_w1"], lp["gine_b1"] = _init_linear(nk(), channels, channels)
        lp["gine_w2"], lp["gine_b2"] = _init_linear(nk(), channels, channels)
        lp["norm1"] = _init_bn(nk(), channels)
        lp["w_qkv"], lp["b_qkv"] = _init_linear(nk(), channels, 3 * channels)
        lp["w_o"], lp["b_o"] = _init_linear(nk(), channels, channels)
        lp["norm2"] = _init_bn(nk(), channels)
        lp["mlp_w1"], lp["mlp_b1"] = _init_linear(nk(), channels, 2 * channels)
        lp["mlp_w2"], lp["mlp_b2"] = _init_linear(nk(), 2 * channels, channels)
        lp["norm3"] = _init_bn(nk(), channels)
        layers.append(lp)
    params["layers"] = layers
    params["head_w1"], params["head_b1"] = _init_linear(nk(), channels, channels // 2)
    params["head_w2"], params["head_b2"] = _init_linear(nk(), channels // 2, channels // 4)
    params["head_w3"], params["head_b3"] = _init_linear(nk(), channels // 4, 138)
    return params


# ------------------------------ GPS forward ---------------------------------

def gps_forward(params, x, pe, edge_index, edge_attr, batch, *, num_graphs, heads):
    n = x.shape[0]

    # ---- input embeddings (index-driven lookups; cheap XLA gather glue) ----
    node_h = jnp.take(params["node_emb"], x[:, 0], axis=0)              # (N, C - pe)
    ea = jnp.take(params["edge_emb"], edge_attr, axis=0)                # (E, C)
    pe_s, pe_b = _bn_fold(params["pe_norm"])
    pe_h = pallas_pe_stem(pe, pe_s, pe_b, params["pe_w"],
                          params["pe_b"].reshape(1, -1))                # (N, pe_dim)
    h = jnp.concatenate([node_h, pe_h], axis=1)                         # (N, C)

    # ---- graph-structure helpers, built once and shared by every layer ----
    # TODO(synk): at scale replace these O(E*N) one-hot matmuls with
    #   scalar-prefetch/DMA gather + in-kernel scatter-add.
    src_oh = jax.nn.one_hot(edge_index[0], n, dtype=jnp.float32)        # (E, N)
    dst_oh_t = jax.nn.one_hot(edge_index[1], n, dtype=jnp.float32).T    # (N, E)
    same_graph = batch[:, None] == batch[None, :]
    attn_bias = jnp.where(same_graph, 0.0, -1e30).astype(jnp.float32)   # (N, N)
    pool_sel = jax.nn.one_hot(batch, num_graphs, dtype=jnp.float32).T   # (B, N)

    # ---- GPSConv stack: one fused Pallas kernel per layer ----
    for lp in params["layers"]:
        h = pallas_gps_layer(lp, h, ea, src_oh, dst_oh_t, attn_bias, heads=heads)

    # ---- readout: global_add_pool + MLP head fused in one kernel ----
    return pallas_head(pool_sel, h, params)


# ---------------------------------- main ------------------------------------

if __name__ == "__main__":
    # Small, deterministic configuration (reference uses channels=64, 10 layers).
    CHANNELS, PE_DIM, NUM_LAYERS, HEADS = 32, 8, 2, 4
    sizes = (9, 7)                      # nodes per graph
    N_NODES = sum(sizes)                # 16
    E0, E1 = 24, 16                     # edges per graph -> 40 total
    num_graphs = len(sizes)

    key = jax.random.PRNGKey(0)
    kp, kx, kpe, ks0, kd0, ks1, kd1, kea = jax.random.split(key, 8)
    params = init_gps_params(kp, CHANNELS, PE_DIM, NUM_LAYERS)

    x = jax.random.randint(kx, (N_NODES, 1), 0, 119, dtype=jnp.int32)
    pe = jax.random.normal(kpe, (N_NODES, 20), jnp.float32)
    src = jnp.concatenate([
        jax.random.randint(ks0, (E0,), 0, sizes[0], dtype=jnp.int32),
        jax.random.randint(ks1, (E1,), sizes[0], N_NODES, dtype=jnp.int32)])
    dst = jnp.concatenate([
        jax.random.randint(kd0, (E0,), 0, sizes[0], dtype=jnp.int32),
        jax.random.randint(kd1, (E1,), sizes[0], N_NODES, dtype=jnp.int32)])
    edge_index = jnp.stack([src, dst])                                  # (2, 40)
    edge_attr = jax.random.randint(kea, (E0 + E1,), 0, 22, dtype=jnp.int32)
    batch = jnp.concatenate([jnp.zeros((sizes[0],), jnp.int32),
                             jnp.ones((sizes[1],), jnp.int32)])

    fwd = jax.jit(functools.partial(gps_forward, num_graphs=num_graphs,
                                    heads=HEADS))
    out = fwd(params, x, pe, edge_index, edge_attr, batch)
    out = jax.block_until_ready(out)
    assert out.shape == (num_graphs, 138)
    assert bool(jnp.all(jnp.isfinite(out)))
    print("KERNEL_OK")
</pallas_src>

<mosaic_0001>
module attributes {stable_mosaic.version = 11 : i64} {
  func.func @_pe_stem_kernel(%arg0: memref<16x20xf32, #tpu.memory_space<vmem>>, %arg1: memref<1x20xf32, #tpu.memory_space<vmem>>, %arg2: memref<1x20xf32, #tpu.memory_space<vmem>>, %arg3: memref<20x8xf32, #tpu.memory_space<vmem>>, %arg4: memref<1x8xf32, #tpu.memory_space<vmem>>, %arg5: memref<16x8xf32, #tpu.memory_space<vmem>>) attributes {dimension_semantics = [], scalar_prefetch = 0 : i64, scratch_operands = 0 : i64, tpu.core_type = #tpu.core_type<tc>} {
    %c0 = arith.constant 0 : index
    %c0_0 = arith.constant 0 : index
    %0 = vector.load %arg0[%c0, %c0_0] : memref<16x20xf32, #tpu.memory_space<vmem>>, vector<16x20xf32>
    %c0_1 = arith.constant 0 : index
    %c0_2 = arith.constant 0 : index
    %1 = vector.load %arg1[%c0_1, %c0_2] : memref<1x20xf32, #tpu.memory_space<vmem>>, vector<1x20xf32>
    %2 = vector.broadcast %1 : vector<1x20xf32> to vector<16x20xf32>
    %3 = arith.mulf %0, %2 : vector<16x20xf32>
    %c0_3 = arith.constant 0 : index
    %c0_4 = arith.constant 0 : index
    %4 = vector.load %arg2[%c0_3, %c0_4] : memref<1x20xf32, #tpu.memory_space<vmem>>, vector<1x20xf32>
    %5 = vector.broadcast %4 : vector<1x20xf32> to vector<16x20xf32>
    %6 = arith.addf %3, %5 : vector<16x20xf32>
    %c0_5 = arith.constant 0 : index
    %c0_6 = arith.constant 0 : index
    %7 = vector.load %arg3[%c0_5, %c0_6] : memref<20x8xf32, #tpu.memory_space<vmem>>, vector<20x8xf32>
    %cst = arith.constant dense<0.000000e+00> : vector<16x8xf32>
    %8 = tpu.matmul %6, %7, %cst {dimension_numbers = #tpu.dot_dimension_numbers<[1], [0], [0], [1], [0, 0, 1, 1], [], []>} : vector<16x20xf32>, vector<20x8xf32>, vector<16x8xf32> -> vector<16x8xf32>
    %c0_7 = arith.constant 0 : index
    %c0_8 = arith.constant 0 : index
    %9 = vector.load %arg4[%c0_7, %c0_8] : memref<1x8xf32, #tpu.memory_space<vmem>>, vector<1x8xf32>
    %10 = vector.broadcast %9 : vector<1x8xf32> to vector<16x8xf32>
    %11 = arith.addf %8, %10 : vector<16x8xf32>
    %c0_9 = arith.constant 0 : index
    %c0_10 = arith.constant 0 : index
    %12 = vector.load %arg5[%c0_9, %c0_10] : memref<16x8xf32, #tpu.memory_space<vmem>>, vector<16x8xf32>
    tpu.vector_store %arg5[%c0_9, %c0_10], %11 {strides = array<i32>} : memref<16x8xf32, #tpu.memory_space<vmem>>, vector<16x8xf32>,
    return
  }
}

module attributes {stable_mosaic.version = 11 : i64} {
  func.func @_head_kernel(%arg0: memref<2x16xf32, #tpu.memory_space<vmem>>, %arg1: memref<16x32xf32, #tpu.memory_space<vmem>>, %arg2: memref<32x16xf32, #tpu.memory_space<vmem>>, %arg3: memref<1x16xf32, #tpu.memory_space<vmem>>, %arg4: memref<16x8xf32, #tpu.memory_space<vmem>>, %arg5: memref<1x8xf32, #tpu.memory_space<vmem>>, %arg6: memref<8x138xf32, #tpu.memory_space<vmem>>, %arg7: memref<1x138xf32, #tpu.memory_space<vmem>>, %arg8: memref<2x138xf32, #tpu.memory_space<vmem>>) attributes {dimension_semantics = [], scalar_prefetch = 0 : i64, scratch_operands = 0 : i64, tpu.core_type = #tpu.core_type<tc>} {
    %c0 = arith.constant 0 : index
    %c0_0 = arith.constant 0 : index
    %0 = vector.load %arg0[%c0, %c0_0] : memref<2x16xf32, #tpu.memory_space<vmem>>, vector<2x16xf32>
    %c0_1 = arith.constant 0 : index
    %c0_2 = arith.constant 0 : index
    %1 = vector.load %arg1[%c0_1, %c0_2] : memref<16x32xf32, #tpu.memory_space<vmem>>, vector<16x32xf32>
    %cst = arith.constant dense<0.000000e+00> : vector<2x32xf32>
    %2 = tpu.matmul %0, %1, %cst {dimension_numbers = #tpu.dot_dimension_numbers<[1], [0], [0], [1], [0, 0, 1, 1], [], []>} : vector<2x16xf32>, vector<16x32xf32>, vector<2x32xf32> -> vector<2x32xf32>
    %c0_3 = arith.constant 0 : index
    %c0_4 = arith.constant 0 : index
    %3 = vector.load %arg2[%c0_3, %c0_4] : memref<32x16xf32, #tpu.memory_space<vmem>>, vector<32x16xf32>
    %cst_5 = arith.constant dense<0.000000e+00> : vector<2x16xf32>
    %4 = tpu.matmul %2, %3, %cst_5 {dimension_numbers = #tpu.dot_dimension_numbers<[1], [0], [0], [1], [0, 0, 1, 1], [], []>} : vector<2x32xf32>, vector<32x16xf32>, vector<2x16xf32> -> vector<2x16xf32>
    %c0_6 = arith.constant 0 : index
    %c0_7 = arith.constant 0 : index
    %5 = vector.load %arg3[%c0_6, %c0_7] : memref<1x16xf32, #tpu.memory_space<vmem>>, vector<1x16xf32>
    %6 = vector.broadcast %5 : vector<1x16xf32> to vector<2x16xf32>
    %7 = arith.addf %4, %6 : vector<2x16xf32>
    %cst_8 = arith.constant 0.000000e+00 : f32
    %8 = vector.broadcast %cst_8 : f32 to vector<2x16xf32>
    %9 = arith.maximumf %7, %8 : vector<2x16xf32>
    %c0_9 = arith.constant 0 : index
    %c0_10 = arith.constant 0 : index
    %10 = vector.load %arg4[%c0_9, %c0_10] : memref<16x8xf32, #tpu.memory_space<vmem>>, vector<16x8xf32>
    %cst_11 = arith.constant dense<0.000000e+00> : vector<2x8xf32>
    %11 = tpu.matmul %9, %10, %cst_11 {dimension_numbers = #tpu.dot_dimension_numbers<[1], [0], [0], [1], [0, 0, 1, 1], [], []>} : vector<2x16xf32>, vector<16x8xf32>, vector<2x8xf32> -> vector<2x8xf32>
    %c0_12 = arith.constant 0 : index
    %c0_13 = arith.constant 0 : index
    %12 = vector.load %arg5[%c0_12, %c0_13] : memref<1x8xf32, #tpu.memory_space<vmem>>, vector<1x8xf32>
    %13 = vector.broadcast %12 : vector<1x8xf32> to vector<2x8xf32>
    %14 = arith.addf %11, %13 : vector<2x8xf32>
    %cst_14 = arith.constant 0.000000e+00 : f32
    %15 = vector.broadcast %cst_14 : f32 to vector<2x8xf32>
    %16 = arith.maximumf %14, %15 : vector<2x8xf32>
    %c0_15 = arith.constant 0 : index
    %c0_16 = arith.constant 0 : index
    %17 = vector.load %arg6[%c0_15, %c0_16] : memref<8x138xf32, #tpu.memory_space<vmem>>, vector<8x138xf32>
    %cst_17 = arith.constant dense<0.000000e+00> : vector<2x138xf32>
    %18 = tpu.matmul %16, %17, %cst_17 {dimension_numbers = #tpu.dot_dimension_numbers<[1], [0], [0], [1], [0, 0, 1, 1], [], []>} : vector<2x8xf32>, vector<8x138xf32>, vector<2x138xf32> -> vector<2x138xf32>
    %c0_18 = arith.constant 0 : index
    %c0_19 = arith.constant 0 : index
    %19 = vector.load %arg7[%c0_18, %c0_19] : memref<1x138xf32, #tpu.memory_space<vmem>>, vector<1x138xf32>
    %20 = vector.broadcast %19 : vector<1x138xf32> to vector<2x138xf32>
    %21 = arith.addf %18, %20 : vector<2x138xf32>
    %c0_20 = arith.constant 0 : index
    %c0_21 = arith.constant 0 : index
    %22 = vector.load %arg8[%c0_20, %c0_21] : memref<2x138xf32, #tpu.memory_space<vmem>>, vector<2x138xf32>
    tpu.vector_store %arg8[%c0_20, %c0_21], %21 {strides = array<i32>} : memref<2x138xf32, #tpu.memory_space<vmem>>, vector<2x138xf32>,
    return
  }
}

module attributes {stable_mosaic.version = 11 : i64} {
  func.func @_gps_layer_kernel(%arg0: memref<16x32xf32, #tpu.memory_space<vmem>>, %arg1: memref<40x32xf32, #tpu.memory_space<vmem>>, %arg2: memref<40x16xf32, #tpu.memory_space<vmem>>, %arg3: memref<16x40xf32, #tpu.memory_space<vmem>>, %arg4: memref<16x16xf32, #tpu.memory_space<vmem>>, %arg5: memref<32x32xf32, #tpu.memory_space<vmem>>, %arg6: memref<1x32xf32, #tpu.memory_space<vmem>>, %arg7: memref<32x32xf32, #tpu.memory_space<vmem>>, %arg8: memref<1x32xf32, #tpu.memory_space<vmem>>, %arg9: memref<1x32xf32, #tpu.memory_space<vmem>>, %arg10: memref<1x32xf32, #tpu.memory_space<vmem>>, %arg11: memref<32x96xf32, #tpu.memory_space<vmem>>, %arg12: memref<1x96xf32, #tpu.memory_space<vmem>>, %arg13: memref<32x32xf32, #tpu.memory_space<vmem>>, %arg14: memref<1x32xf32, #tpu.memory_space<vmem>>, %arg15: memref<1x32xf32, #tpu.memory_space<vmem>>, %arg16: memref<1x32xf32, #tpu.memory_space<vmem>>, %arg17: memref<32x64xf32, #tpu.memory_space<vmem>>, %arg18: memref<1x64xf32, #tpu.memory_space<vmem>>, %arg19: memref<64x32xf32, #tpu.memory_space<vmem>>, %arg20: memref<1x32xf32, #tpu.memory_space<vmem>>, %arg21: memref<1x32xf32, #tpu.memory_space<vmem>>, %arg22: memref<1x32xf32, #tpu.memory_space<vmem>>, %arg23: memref<16x32xf32, #tpu.memory_space<vmem>>) attributes {dimension_semantics = [], scalar_prefetch = 0 : i64, scratch_operands = 0 : i64, tpu.core_type = #tpu.core_type<tc>} {
    %c0 = arith.constant 0 : index
    %c0_0 = arith.constant 0 : index
    %0 = vector.load %arg0[%c0, %c0_0] : memref<16x32xf32, #tpu.memory_space<vmem>>, vector<16x32xf32>
    %c0_1 = arith.constant 0 : index
    %c0_2 = arith.constant 0 : index
    %1 = vector.load %arg2[%c0_1, %c0_2] : memref<40x16xf32, #tpu.memory_space<vmem>>, vector<40x16xf32>
    %cst = arith.constant dense<0.000000e+00> : vector<40x32xf32>
    %2 = tpu.matmul %1, %0, %cst {dimension_numbers = #tpu.dot_dimension_numbers<[1], [0], [0], [1], [0, 0, 1, 1], [], []>} : vector<40x16xf32>, vector<16x32xf32>, vector<40x32xf32> -> vector<40x32xf32>
    %c0_3 = arith.constant 0 : index
    %c0_4 = arith.constant 0 : index
    %3 = vector.load %arg1[%c0_3, %c0_4] : memref<40x32xf32, #tpu.memory_space<vmem>>, vector<40x32xf32>
    %4 = arith.addf %2, %3 : vector<40x32xf32>
    %cst_5 = arith.constant 0.000000e+00 : f32
    %5 = vector.broadcast %cst_5 : f32 to vector<40x32xf32>
    %6 = arith.maximumf %4, %5 : vector<40x32xf32>
    %c0_6 = arith.constant 0 : index
    %c0_7 = arith.constant 0 : index
    %7 = vector.load %arg3[%c0_6, %c0_7] : memref<16x40xf32, #tpu.memory_space<vmem>>, vector<16x40xf32>
    %cst_8 = arith.constant dense<0.000000e+00> : vector<16x32xf32>
    %8 = tpu.matmul %7, %6, %cst_8 {dimension_numbers = #tpu.dot_dimension_numbers<[1], [0], [0], [1], [0, 0, 1, 1], [], []>} : vector<16x40xf32>, vector<40x32xf32>, vector<16x32xf32> -> vector<16x32xf32>
    %9 = arith.addf %8, %0 : vector<16x32xf32>
    %c0_9 = arith.constant 0 : index
    %c0_10 = arith.constant 0 : index
    %10 = vector.load %arg5[%c0_9, %c0_10] : memref<32x32xf32, #tpu.memory_space<vmem>>, vector<32x32xf32>
    %cst_11 = arith.constant dense<0.000000e+00> : vector<16x32xf32>
    %11 = tpu.matmul %9, %10, %cst_11 {dimension_numbers = #tpu.dot_dimension_numbers<[1], [0], [0], [1], [0, 0, 1, 1], [], []>} : vector<16x32xf32>, vector<32x32xf32>, vector<16x32xf32> -> vector<16x32xf32>
    %c0_12 = arith.constant 0 : index
    %c0_13 = arith.constant 0 : index
    %12 = vector.load %arg6[%c0_12, %c0_13] : memref<1x32xf32, #tpu.memory_space<vmem>>, vector<1x32xf32>
    %13 = vector.broadcast %12 : vector<1x32xf32> to vector<16x32xf32>
    %14 = arith.addf %11, %13 : vector<16x32xf32>
    %cst_14 = arith.constant 0.000000e+00 : f32
    %15 = vector.broadcast %cst_14 : f32 to vector<16x32xf32>
    %16 = arith.maximumf %14, %15 : vector<16x32xf32>
    %c0_15 = arith.constant 0 : index
    %c0_16 = arith.constant 0 : index
    %17 = vector.load %arg7[%c0_15, %c0_16] : memref<32x32xf32, #tpu.memory_space<vmem>>, vector<32x32xf32>
    %cst_17 = arith.constant dense<0.000000e+00> : vector<16x32xf32>
    %18 = tpu.matmul %16, %17, %cst_17 {dimension_numbers = #tpu.dot_dimension_numbers<[1], [0], [0], [1], [0, 0, 1, 1], [], []>} : vector<16x32xf32>, vector<32x32xf32>, vector<16x32xf32> -> vector<16x32xf32>
    %c0_18 = arith.constant 0 : index
    %c0_19 = arith.constant 0 : index
    %19 = vector.load %arg8[%c0_18, %c0_19] : memref<1x32xf32, #tpu.memory_space<vmem>>, vector<1x32xf32>
    %20 = vector.broadcast %19 : vector<1x32xf32> to vector<16x32xf32>
    %21 = arith.addf %18, %20 : vector<16x32xf32>
    %22 = arith.addf %21, %0 : vector<16x32xf32>
    %c0_20 = arith.constant 0 : index
    %c0_21 = arith.constant 0 : index
    %23 = vector.load %arg9[%c0_20, %c0_21] : memref<1x32xf32, #tpu.memory_space<vmem>>, vector<1x32xf32>
    %24 = vector.broadcast %23 : vector<1x32xf32> to vector<16x32xf32>
    %25 = arith.mulf %22, %24 : vector<16x32xf32>
    %c0_22 = arith.constant 0 : index
    %c0_23 = arith.constant 0 : index
    %26 = vector.load %arg10[%c0_22, %c0_23] : memref<1x32xf32, #tpu.memory_space<vmem>>, vector<1x32xf32>
    %27 = vector.broadcast %26 : vector<1x32xf32> to vector<16x32xf32>
    %28 = arith.addf %25, %27 : vector<16x32xf32>
    %c0_24 = arith.constant 0 : index
    %c0_25 = arith.constant 0 : index
    %29 = vector.load %arg11[%c0_24, %c0_25] : memref<32x96xf32, #tpu.memory_space<vmem>>, vector<32x96xf32>
    %cst_26 = arith.constant dense<0.000000e+00> : vector<16x96xf32>
    %30 = tpu.matmul %0, %29, %cst_26 {dimension_numbers = #tpu.dot_dimension_numbers<[1], [0], [0], [1], [0, 0, 1, 1], [], []>} : vector<16x32xf32>, vector<32x96xf32>, vector<16x96xf32> -> vector<16x96xf32>
    %c0_27 = arith.constant 0 : index
    %c0_28 = arith.constant 0 : index
    %31 = vector.load %arg12[%c0_27, %c0_28] : memref<1x96xf32, #tpu.memory_space<vmem>>, vector<1x96xf32>
    %32 = vector.broadcast %31 : vector<1x96xf32> to vector<16x96xf32>
    %33 = arith.addf %30, %32 : vector<16x96xf32>
    %c0_29 = arith.constant 0 : index
    %c0_30 = arith.constant 0 : index
    %34 = vector.load %arg4[%c0_29, %c0_30] : memref<16x16xf32, #tpu.memory_space<vmem>>, vector<16x16xf32>
    %c0_31 = arith.constant 0 : index
    %c0_32 = arith.constant 0 : index
    %35 = vector.load %arg13[%c0_31, %c0_32] : memref<32x32xf32, #tpu.memory_space<vmem>>, vector<32x32xf32>
    %cst_33 = arith.constant 0.000000e+00 : f32
    %36 = vector.broadcast %cst_33 : f32 to vector<16x32xf32>
    %37 = vector.extract_strided_slice %33 {offsets = [0, 0], sizes = [16, 8], strides = [1, 1]} : vector<16x96xf32> to vector<16x8xf32>
    %38 = vector.extract_strided_slice %33 {offsets = [0, 32], sizes = [16, 8], strides = [1, 1]} : vector<16x96xf32> to vector<16x8xf32>
    %39 = vector.extract_strided_slice %33 {offsets = [0, 64], sizes = [16, 8], strides = [1, 1]} : vector<16x96xf32> to vector<16x8xf32>
    %40 = tpu.transpose %38, [1, 0] : vector<16x8xf32> -> vector<8x16xf32>
    %cst_34 = arith.constant dense<0.000000e+00> : vector<16x16xf32>
    %41 = tpu.matmul %37, %40, %cst_34 {dimension_numbers = #tpu.dot_dimension_numbers<[1], [0], [0], [1], [0, 0, 1, 1], [], []>} : vector<16x8xf32>, vector<8x16xf32>, vector<16x16xf32> -> vector<16x16xf32>
    %cst_35 = arith.constant 0.353553385 : f32
    %42 = vector.broadcast %cst_35 : f32 to vector<16x16xf32>
    %43 = arith.mulf %41, %42 : vector<16x16xf32>
    %44 = arith.addf %43, %34 : vector<16x16xf32>
    %cst_36 = arith.constant dense<0xFF800000> : vector<16xf32>
    %45 = vector.multi_reduction <maximumf>, %44, %cst_36 [1] : vector<16x16xf32> to vector<16xf32>
    %46 = vector.shape_cast %45 : vector<16xf32> to vector<16x1xf32>
    %47 = vector.broadcast %46 : vector<16x1xf32> to vector<16x16xf32>
    %48 = arith.subf %44, %47 : vector<16x16xf32>
    %49 = math.exp %48 : vector<16x16xf32>
    %cst_37 = arith.constant dense<0.000000e+00> : vector<16xf32>
    %50 = vector.multi_reduction <add>, %49, %cst_37 [1] : vector<16x16xf32> to vector<16xf32>
    %51 = vector.shape_cast %50 : vector<16xf32> to vector<16x1xf32>
    %52 = tpu.reciprocal %51 {approx = true} : vector<16x1xf32> -> vector<16x1xf32>
    %53 = vector.broadcast %52 : vector<16x1xf32> to vector<16x16xf32>
    %54 = arith.mulf %49, %53 : vector<16x16xf32>
    %cst_38 = arith.constant dense<0.000000e+00> : vector<16x8xf32>
    %55 = tpu.matmul %54, %39, %cst_38 {dimension_numbers = #tpu.dot_dimension_numbers<[1], [0], [0], [1], [0, 0, 1, 1], [], []>} : vector<16x16xf32>, vector<16x8xf32>, vector<16x8xf32> -> vector<16x8xf32>
    %56 = vector.extract_strided_slice %35 {offsets = [0, 0], sizes = [8, 32], strides = [1, 1]} : vector<32x32xf32> to vector<8x32xf32>
    %cst_39 = arith.constant dense<0.000000e+00> : vector<16x32xf32>
    %57 = tpu.matmul %55, %56, %cst_39 {dimension_numbers = #tpu.dot_dimension_numbers<[1], [0], [0], [1], [0, 0, 1, 1], [], []>} : vector<16x8xf32>, vector<8x32xf32>, vector<16x32xf32> -> vector<16x32xf32>
    %58 = arith.addf %36, %57 : vector<16x32xf32>
    %59 = vector.extract_strided_slice %33 {offsets = [0, 8], sizes = [16, 8], strides = [1, 1]} : vector<16x96xf32> to vector<16x8xf32>
    %60 = vector.extract_strided_slice %33 {offsets = [0, 40], sizes = [16, 8], strides = [1, 1]} : vector<16x96xf32> to vector<16x8xf32>
    %61 = vector.extract_strided_slice %33 {offsets = [0, 72], sizes = [16, 8], strides = [1, 1]} : vector<16x96xf32> to vector<16x8xf32>
    %62 = tpu.transpose %60, [1, 0] : vector<16x8xf32> -> vector<8x16xf32>
    %cst_40 = arith.constant dense<0.000000e+00> : vector<16x16xf32>
    %63 = tpu.matmul %59, %62, %cst_40 {dimension_numbers = #tpu.dot_dimension_numbers<[1], [0], [0], [1], [0, 0, 1, 1], [], []>} : vector<16x8xf32>, vector<8x16xf32>, vector<16x16xf32> -> vector<16x16xf32>
    %cst_41 = arith.constant 0.353553385 : f32
    %64 = vector.broadcast %cst_41 : f32 to vector<16x16xf32>
    %65 = arith.mulf %63, %64 : vector<16x16xf32>
    %66 = arith.addf %65, %34 : vector<16x16xf32>
    %cst_42 = arith.constant dense<0xFF800000> : vector<16xf32>
    %67 = vector.multi_reduction <maximumf>, %66, %cst_42 [1] : vector<16x16xf32> to vector<16xf32>
    %68 = vector.shape_cast %67 : vector<16xf32> to vector<16x1xf32>
    %69 = vector.broadcast %68 : vector<16x1xf32> to vector<16x16xf32>
    %70 = arith.subf %66, %69 : vector<16x16xf32>
    %71 = math.exp %70 : vector<16x16xf32>
    %cst_43 = arith.constant dense<0.000000e+00> : vector<16xf32>
    %72 = vector.multi_reduction <add>, %71, %cst_43 [1] : vector<16x16xf32> to vector<16xf32>
    %73 = vector.shape_cast %72 : vector<16xf32> to vector<16x1xf32>
    %74 = tpu.reciprocal %73 {approx = true} : vector<16x1xf32> -> vector<16x1xf32>
    %75 = vector.broadcast %74 : vector<16x1xf32> to vector<16x16xf32>
    %76 = arith.mulf %71, %75 : vector<16x16xf32>
    %cst_44 = arith.constant dense<0.000000e+00> : vector<16x8xf32>
    %77 = tpu.matmul %76, %61, %cst_44 {dimension_numbers = #tpu.dot_dimension_numbers<[1], [0], [0], [1], [0, 0, 1, 1], [], []>} : vector<16x16xf32>, vector<16x8xf32>, vector<16x8xf32> -> vector<16x8xf32>
    %78 = vector.extract_strided_slice %35 {offsets = [8, 0], sizes = [8, 32], strides = [1, 1]} : vector<32x32xf32> to vector<8x32xf32>
    %cst_45 = arith.constant dense<0.000000e+00> : vector<16x32xf32>
    %79 = tpu.matmul %77, %78, %cst_45 {dimension_numbers = #tpu.dot_dimension_numbers<[1], [0], [0], [1], [0, 0, 1, 1], [], []>} : vector<16x8xf32>, vector<8x32xf32>, vector<16x32xf32> -> vector<16x32xf32>
    %80 = arith.addf %58, %79 : vector<16x32xf32>
    %81 = vector.extract_strided_slice %33 {offsets = [0, 16], sizes = [16, 8], strides = [1, 1]} : vector<16x96xf32> to vector<16x8xf32>
    %82 = vector.extract_strided_slice %33 {offsets = [0, 48], sizes = [16, 8], strides = [1, 1]} : vector<16x96xf32> to vector<16x8xf32>
    %83 = vector.extract_strided_slice %33 {offsets = [0, 80], sizes = [16, 8], strides = [1, 1]} : vector<16x96xf32> to vector<16x8xf32>
    %84 = tpu.transpose %82, [1, 0] : vector<16x8xf32> -> vector<8x16xf32>
    %cst_46 = arith.constant dense<0.000000e+00> : vector<16x16xf32>
    %85 = tpu.matmul %81, %84, %cst_46 {dimension_numbers = #tpu.dot_dimension_numbers<[1], [0], [0], [1], [0, 0, 1, 1], [], []>} : vector<16x8xf32>, vector<8x16xf32>, vector<16x16xf32> -> vector<16x16xf32>
    %cst_47 = arith.constant 0.353553385 : f32
    %86 = vector.broadcast %cst_47 : f32 to vector<16x16xf32>
    %87 = arith.mulf %85, %86 : vector<16x16xf32>
    %88 = arith.addf %87, %34 : vector<16x16xf32>
    %cst_48 = arith.constant dense<0xFF800000> : vector<16xf32>
    %89 = vector.multi_reduction <maximumf>, %88, %cst_48 [1] : vector<16x16xf32> to vector<16xf32>
    %90 = vector.shape_cast %89 : vector<16xf32> to vector<16x1xf32>
    %91 = vector.broadcast %90 : vector<16x1xf32> to vector<16x16xf32>
    %92 = arith.subf %88, %91 : vector<16x16xf32>
    %93 = math.exp %92 : vector<16x16xf32>
    %cst_49 = arith.constant dense<0.000000e+00> : vector<16xf32>
    %94 = vector.multi_reduction <add>, %93, %cst_49 [1] : vector<16x16xf32> to vector<16xf32>
    %95 = vector.shape_cast %94 : vector<16xf32> to vector<16x1xf32>
    %96 = tpu.reciprocal %95 {approx = true} : vector<16x1xf32> -> vector<16x1xf32>
    %97 = vector.broadcast %96 : vector<16x1xf32> to vector<16x16xf32>
    %98 = arith.mulf %93, %97 : vector<16x16xf32>
    %cst_50 = arith.constant dense<0.000000e+00> : vector<16x8xf32>
    %99 = tpu.matmul %98, %83, %cst_50 {dimension_numbers = #tpu.dot_dimension_numbers<[1], [0], [0], [1], [0, 0, 1, 1], [], []>} : vector<16x16xf32>, vector<16x8xf32>, vector<16x8xf32> -> vector<16x8xf32>
    %100 = vector.extract_strided_slice %35 {offsets = [16, 0], sizes = [8, 32], strides = [1, 1]} : vector<32x32xf32> to vector<8x32xf32>
    %cst_51 = arith.constant dense<0.000000e+00> : vector<16x32xf32>
    %101 = tpu.matmul %99, %100, %cst_51 {dimension_numbers = #tpu.dot_dimension_numbers<[1], [0], [0], [1], [0, 0, 1, 1], [], []>} : vector<16x8xf32>, vector<8x32xf32>, vector<16x32xf32> -> vector<16x32xf32>
    %102 = arith.addf %80, %101 : vector<16x32xf32>
    %103 = vector.extract_strided_slice %33 {offsets = [0, 24], sizes = [16, 8], strides = [1, 1]} : vector<16x96xf32> to vector<16x8xf32>
    %104 = vector.extract_strided_slice %33 {offsets = [0, 56], sizes = [16, 8], strides = [1, 1]} : vector<16x96xf32> to vector<16x8xf32>
    %105 = vector.extract_strided_slice %33 {offsets = [0, 88], sizes = [16, 8], strides = [1, 1]} : vector<16x96xf32> to vector<16x8xf32>
    %106 = tpu.transpose %104, [1, 0] : vector<16x8xf32> -> vector<8x16xf32>
    %cst_52 = arith.constant dense<0.000000e+00> : vector<16x16xf32>
    %107 = tpu.matmul %103, %106, %cst_52 {dimension_numbers = #tpu.dot_dimension_numbers<[1], [0], [0], [1], [0, 0, 1, 1], [], []>} : vector<16x8xf32>, vector<8x16xf32>, vector<16x16xf32> -> vector<16x16xf32>
    %cst_53 = arith.constant 0.353553385 : f32
    %108 = vector.broadcast %cst_53 : f32 to vector<16x16xf32>
    %109 = arith.mulf %107, %108 : vector<16x16xf32>
    %110 = arith.addf %109, %34 : vector<16x16xf32>
    %cst_54 = arith.constant dense<0xFF800000> : vector<16xf32>
    %111 = vector.multi_reduction <maximumf>, %110, %cst_54 [1] : vector<16x16xf32> to vector<16xf32>
    %112 = vector.shape_cast %111 : vector<16xf32> to vector<16x1xf32>
    %113 = vector.broadcast %112 : vector<16x1xf32> to vector<16x16xf32>
    %114 = arith.subf %110, %113 : vector<16x16xf32>
    %115 = math.exp %114 : vector<16x16xf32>
    %cst_55 = arith.constant dense<0.000000e+00> : vector<16xf32>
    %116 = vector.multi_reduction <add>, %115, %cst_55 [1] : vector<16x16xf32> to vector<16xf32>
    %117 = vector.shape_cast %116 : vector<16xf32> to vector<16x1xf32>
    %118 = tpu.reciprocal %117 {approx = true} : vector<16x1xf32> -> vector<16x1xf32>
    %119 = vector.broadcast %118 : vector<16x1xf32> to vector<16x16xf32>
    %120 = arith.mulf %115, %119 : vector<16x16xf32>
    %cst_56 = arith.constant dense<0.000000e+00> : vector<16x8xf32>
    %121 = tpu.matmul %120, %105, %cst_56 {dimension_numbers = #tpu.dot_dimension_numbers<[1], [0], [0], [1], [0, 0, 1, 1], [], []>} : vector<16x16xf32>, vector<16x8xf32>, vector<16x8xf32> -> vector<16x8xf32>
    %122 = vector.extract_strided_slice %35 {offsets = [24, 0], sizes = [8, 32], strides = [1, 1]} : vector<32x32xf32> to vector<8x32xf32>
    %cst_57 = arith.constant dense<0.000000e+00> : vector<16x32xf32>
    %123 = tpu.matmul %121, %122, %cst_57 {dimension_numbers = #tpu.dot_dimension_numbers<[1], [0], [0], [1], [0, 0, 1, 1], [], []>} : vector<16x8xf32>, vector<8x32xf32>, vector<16x32xf32> -> vector<16x32xf32>
    %124 = arith.addf %102, %123 : vector<16x32xf32>
    %c0_58 = arith.constant 0 : index
    %c0_59 = arith.constant 0 : index
    %125 = vector.load %arg14[%c0_58, %c0_59] : memref<1x32xf32, #tpu.memory_space<vmem>>, vector<1x32xf32>
    %126 = vector.broadcast %125 : vector<1x32xf32> to vector<16x32xf32>
    %127 = arith.addf %124, %126 : vector<16x32xf32>
    %128 = arith.addf %127, %0 : vector<16x32xf32>
    %c0_60 = arith.constant 0 : index
    %c0_61 = arith.constant 0 : index
    %129 = vector.load %arg15[%c0_60, %c0_61] : memref<1x32xf32, #tpu.memory_space<vmem>>, vector<1x32xf32>
    %130 = vector.broadcast %129 : vector<1x32xf32> to vector<16x32xf32>
    %131 = arith.mulf %128, %130 : vector<16x32xf32>
    %c0_62 = arith.constant 0 : index
    %c0_63 = arith.constant 0 : index
    %132 = vector.load %arg16[%c0_62, %c0_63] : memref<1x32xf32, #tpu.memory_space<vmem>>, vector<1x32xf32>
    %133 = vector.broadcast %132 : vector<1x32xf32> to vector<16x32xf32>
    %134 = arith.addf %131, %133 : vector<16x32xf32>
    %135 = arith.addf %28, %134 : vector<16x32xf32>
    %c0_64 = arith.constant 0 : index
    %c0_65 = arith.constant 0 : index
    %136 = vector.load %arg17[%c0_64, %c0_65] : memref<32x64xf32, #tpu.memory_space<vmem>>, vector<32x64xf32>
    %cst_66 = arith.constant dense<0.000000e+00> : vector<16x64xf32>
    %137 = tpu.matmul %135, %136, %cst_66 {dimension_numbers = #tpu.dot_dimension_numbers<[1], [0], [0], [1], [0, 0, 1, 1], [], []>} : vector<16x32xf32>, vector<32x64xf32>, vector<16x64xf32> -> vector<16x64xf32>
    %c0_67 = arith.constant 0 : index
    %c0_68 = arith.constant 0 : index
    %138 = vector.load %arg18[%c0_67, %c0_68] : memref<1x64xf32, #tpu.memory_space<vmem>>, vector<1x64xf32>
    %139 = vector.broadcast %138 : vector<1x64xf32> to vector<16x64xf32>
    %140 = arith.addf %137, %139 : vector<16x64xf32>
    %cst_69 = arith.constant 0.000000e+00 : f32
    %141 = vector.broadcast %cst_69 : f32 to vector<16x64xf32>
    %142 = arith.maximumf %140, %141 : vector<16x64xf32>
    %c0_70 = arith.constant 0 : index
    %c0_71 = arith.constant 0 : index
    %143 = vector.load %arg19[%c0_70, %c0_71] : memref<64x32xf32, #tpu.memory_space<vmem>>, vector<64x32xf32>
    %cst_72 = arith.constant dense<0.000000e+00> : vector<16x32xf32>
    %144 = tpu.matmul %142, %143, %cst_72 {dimension_numbers = #tpu.dot_dimension_numbers<[1], [0], [0], [1], [0, 0, 1, 1], [], []>} : vector<16x64xf32>, vector<64x32xf32>, vector<16x32xf32> -> vector<16x32xf32>
    %c0_73 = arith.constant 0 : index
    %c0_74 = arith.constant 0 : index
    %145 = vector.load %arg20[%c0_73, %c0_74] : memref<1x32xf32, #tpu.memory_space<vmem>>, vector<1x32xf32>
    %146 = vector.broadcast %145 : vector<1x32xf32> to vector<16x32xf32>
    %147 = arith.addf %144, %146 : vector<16x32xf32>
    %148 = arith.addf %135, %147 : vector<16x32xf32>
    %c0_75 = arith.constant 0 : index
    %c0_76 = arith.constant 0 : index
    %149 = vector.load %arg21[%c0_75, %c0_76] : memref<1x32xf32, #tpu.memory_space<vmem>>, vector<1x32xf32>
    %150 = vector.broadcast %149 : vector<1x32xf32> to vector<16x32xf32>
    %151 = arith.mulf %148, %150 : vector<16x32xf32>
    %c0_77 = arith.constant 0 : index
    %c0_78 = arith.constant 0 : index
    %152 = vector.load %arg22[%c0_77, %c0_78] : memref<1x32xf32, #tpu.memory_space<vmem>>, vector<1x32xf32>
    %153 = vector.broadcast %152 : vector<1x32xf32> to vector<16x32xf32>
    %154 = arith.addf %151, %153 : vector<16x32xf32>
    %c0_79 = arith.constant 0 : index
    %c0_80 = arith.constant 0 : index
    %155 = vector.load %arg23[%c0_79, %c0_80] : memref<16x32xf32, #tpu.memory_space<vmem>>, vector<16x32xf32>
    tpu.vector_store %arg23[%c0_79, %c0_80], %154 {strides = array<i32>} : memref<16x32xf32, #tpu.memory_space<vmem>>, vector<16x32xf32>,
    return
  }
}

</mosaic_0001>

<llo_original>
// kernel: gps_forward.4
$region0: #{gps_forward.4}
  #allocation0 [shape = 'u32[]', space=smem, size = 0x4, offset = 0x4, fixed_abs, tag = 'smem constant byte address 0x4 - core index']
  #allocation1 [shape = 'u32[72,128]{1,0:T(1,128)}', space=vmem, size = 0x9000, scoped, tag = 'internal scratch']
  %s0 = inlined_call_operand.vmem [shape: f32[16,20], index: 0, kind: input, shape index: {}]
  %s1 = inlined_call_operand.vmem [shape: f32[1,20], index: 1, kind: input, shape index: {}]
  %s2 = inlined_call_operand.vmem [shape: f32[1,20], index: 2, kind: input, shape index: {}]
  %s3 = inlined_call_operand.vmem [shape: f32[20,8], index: 3, kind: input, shape index: {}]
  %s4 = inlined_call_operand.vmem [shape: f32[1,8], index: 4, kind: input, shape index: {}]
  %s5 = inlined_call_operand.vmem [shape: f32[16,8], index: 5, kind: output, shape index: {}]
  %s6 = sld [smem:[#allocation0]]
  $region30: #{gps_forward.4} parent=0
    _
  %s8 = ssub.s32 1, %s6
  %s9 = scalar_select 0, %s8, %s6
  // Predicated region
  $region2: #{gps_forward.4} parent=0 // pred_check
    _
  $region3: #{gps_forward.4} parent=0 // pred_check_branch
    %11 = sbr.rel (0) target = $region5
  $region4: #{gps_forward.4} parent=0 // pred_region
    _
  $region5: #{gps_forward.4} parent=0 // pred_fallthru
    _
  // Predicated region
  $region6: #{gps_forward.4} parent=0 // pred_check
    _
  $region7: #{gps_forward.4} parent=0 // pred_check_branch
    %13 = sbr.rel (0) target = $region9
  $region8: #{gps_forward.4} parent=0 // pred_region
    _
  $region9: #{gps_forward.4} parent=0 // pred_fallthru
    _
  // Predicated region
  $region10: #{gps_forward.4} parent=0 // pred_check
    _
  $region11: #{gps_forward.4} parent=0 // pred_check_branch
    %15 = sbr.rel (0) target = $region13
  $region12: #{gps_forward.4} parent=0 // pred_region
    _
  $region13: #{gps_forward.4} parent=0 // pred_fallthru
    _
  // Predicated region
  $region14: #{gps_forward.4} parent=0 // pred_check
    _
  $region15: #{gps_forward.4} parent=0 // pred_check_branch
    %17 = sbr.rel (0) target = $region17
  $region16: #{gps_forward.4} parent=0 // pred_region
    _
  $region17: #{gps_forward.4} parent=0 // pred_fallthru
    _
  // Predicated region
  $region18: #{gps_forward.4} parent=0 // pred_check
    _
  $region19: #{gps_forward.4} parent=0 // pred_check_branch
    %19 = sbr.rel (0) target = $region21
  $region20: #{gps_forward.4} parent=0 // pred_region
    _
  $region21: #{gps_forward.4} parent=0 // pred_fallthru
    _
  %v20 = vld [vmem:[%s0] sm:$0xff]
  %v21 = vld [vmem:[%s0 + $0x8] sm:$0xff]
  %v22 = vld [vmem:[%s1] sm:$0x1]
  %v24 = vperm.slane %v22, 0
  %v26 = vmul.f32 %v20, %v24
  %v27 = vmul.f32 %v21, %v24
  %v28 = vld [vmem:[%s2] sm:$0x1]
  %v30 = vperm.slane %v28, 0
  %v32 = vadd.f32 %v26, %v30
  %v33 = vadd.f32 %v27, %v30
  %v34 = vld [vmem:[%s3] sm:$0xff]
  %v35 = vld [vmem:[%s3 + $0x8] sm:$0xff]
  %v36 = vld [vmem:[%s3 + $0x10] sm:$0xf]
  %v37 = vld [vmem:[%s4] sm:$0x1]
  %v39 = vperm.slane %v37, 0
  %vm41 = vcmask 162816
  %v43 = vsel %vm41, %v32, 0
  %v46 = vsel %vm41, %v33, 0
  %vm48 = vcmask 1043456
  %v50 = vsel %vm48, %v36, 0
  %52 = vmatpush.msra.mxu0 0.0
  %53 = vmatpush.msra.mxu0 0.0
  %54 = vmatpush.msra.mxu0 0.0
  %55 = vmatpush.msra.mxu0 0.0
  %56 = vmatpush.msra.mxu0 0.0
  %57 = vmatpush.msra.mxu0 0.0
  %58 = vmatpush.msra.mxu0 0.0
  %59 = vmatpush.msra.mxu0 0.0
  %60 = vmatpush.msra.mxu0 0.0
  %61 = vmatpush.msra.mxu0 0.0
  %62 = vmatpush.msra.mxu0 0.0
  %63 = vmatpush.msra.mxu0 0.0
  %64 = vmatpush.msra.mxu0 0.0
  %65 = vmatpush.msra.mxu0 %v50
  %66 = vmatpush.msra.mxu0 %v35
  %67 = vmatpush.msra.mxu0 %v34
  %68 = vmatmul.f32.gmra.mxu0 %v43
  %v69 = vpop.f32.mrf.mxu0
  %v70 = vadd.f32 %v39, %v69
  %71 = vmatmul.f32.gmra.mxu0 %v46
  %v72 = vpop.f32.mrf.mxu0
  %v73 = vadd.f32 %v39, %v72
  %74 = vdwg.mxu0
  %vm75 = vcmask 64512
  %76 = vst.msk [vmem:[%s5] sm:$0xff] %vm75, %v70
  %77 = vst.msk [vmem:[%s5 + $0x8] sm:$0xff] %vm75, %v73
  // Predicated region
  $region22: #{gps_forward.4} parent=0 // pred_check
    _
  $region23: #{gps_forward.4} parent=0 // pred_check_branch
    %79 = sbr.rel (0) target = $region25
  $region24: #{gps_forward.4} parent=0 // pred_region
    _
  $region25: #{gps_forward.4} parent=0 // pred_fallthru
    _
  // Predicated region
  $region26: #{gps_forward.4} parent=0 // pred_check
    _
  $region27: #{gps_forward.4} parent=0 // pred_check_branch
    %81 = sbr.rel (0) target = $region29
  $region28: #{gps_forward.4} parent=0 // pred_region
    _
  $region29: #{gps_forward.4} parent=0 // pred_fallthru
    _

// kernel: gps_forward.7
$region0: #{gps_forward.7}
  #allocation0 [shape = 'u32[]', space=smem, size = 0x4, offset = 0x4, fixed_abs, tag = 'smem constant byte address 0x4 - core index']
  #allocation1 [shape = 'u32[72,128]{1,0:T(1,128)}', space=vmem, size = 0x9000, scoped, tag = 'internal scratch']
  %s0 = inlined_call_operand.vmem [shape: f32[2,16], index: 0, kind: input, shape index: {}]
  %s1 = inlined_call_operand.vmem [shape: f32[16,32], index: 1, kind: input, shape index: {}]
  %s2 = inlined_call_operand.vmem [shape: f32[32,16], index: 2, kind: input, shape index: {}]
  %s3 = inlined_call_operand.vmem [shape: f32[1,16], index: 3, kind: input, shape index: {}]
  %s4 = inlined_call_operand.vmem [shape: f32[16,8], index: 4, kind: input, shape index: {}]
  %s5 = inlined_call_operand.vmem [shape: f32[1,8], index: 5, kind: input, shape index: {}]
  %s6 = inlined_call_operand.vmem [shape: f32[8,138], index: 6, kind: input, shape index: {}]
  %s7 = inlined_call_operand.vmem [shape: f32[1,138], index: 7, kind: input, shape index: {}]
  %s8 = inlined_call_operand.hbm [shape: f32[2,138], index: 8, kind: output, shape index: {}]
  %s9 = sld [smem:[#allocation0]]
  $region42: #{gps_forward.7} parent=0
    _
  %s11 = ssub.s32 1, %s9
  %s12 = scalar_select 0, %s11, %s9
  $region1: #{gps_forward.7} parent=0
    #allocation2 [shape = 'u8[2048]{0}', space=vmem, size = 0x800, scoped, tag = 'output window, operand 0, single buffered']
    #allocation3 [shape = 's32[1]{0}', space=sflag, size = 0x4, scoped, tag = 'scoped memory for gps_forward.7']
    %13 = vsyncpa [#allocation3], 0
    // Predicated region
    $region2: #{gps_forward.7} parent=1 // pred_check
      _
    $region3: #{gps_forward.7} parent=1 // pred_check_branch
      %15 = sbr.rel (0) target = $region5
    $region4: #{gps_forward.7} parent=1 // pred_region
      _
    $region5: #{gps_forward.7} parent=1 // pred_fallthru
      _
    // Predicated region
    $region6: #{gps_forward.7} parent=1 // pred_check
      _
    $region7: #{gps_forward.7} parent=1 // pred_check_branch
      %17 = sbr.rel (0) target = $region9
    $region8: #{gps_forward.7} parent=1 // pred_region
      _
    $region9: #{gps_forward.7} parent=1 // pred_fallthru
      _
    // Predicated region
    $region10: #{gps_forward.7} parent=1 // pred_check
      _
    $region11: #{gps_forward.7} parent=1 // pred_check_branch
      %19 = sbr.rel (0) target = $region13
    $region12: #{gps_forward.7} parent=1 // pred_region
      _
    $region13: #{gps_forward.7} parent=1 // pred_fallthru
      _
    // Predicated region
    $region14: #{gps_forward.7} parent=1 // pred_check
      _
    $region15: #{gps_forward.7} parent=1 // pred_check_branch
      %21 = sbr.rel (0) target = $region17
    $region16: #{gps_forward.7} parent=1 // pred_region
      _
    $region17: #{gps_forward.7} parent=1 // pred_fallthru
      _
    // Predicated region
    $region18: #{gps_forward.7} parent=1 // pred_check
      _
    $region19: #{gps_forward.7} parent=1 // pred_check_branch
      %23 = sbr.rel (0) target = $region21
    $region20: #{gps_forward.7} parent=1 // pred_region
      _
    $region21: #{gps_forward.7} parent=1 // pred_fallthru
      _
    // Predicated region
    $region22: #{gps_forward.7} parent=1 // pred_check
      _
    $region23: #{gps_forward.7} parent=1 // pred_check_branch
      %25 = sbr.rel (0) target = $region25
    $region24: #{gps_forward.7} parent=1 // pred_region
      _
    $region25: #{gps_forward.7} parent=1 // pred_fallthru
      _
    // Predicated region
    $region26: #{gps_forward.7} parent=1 // pred_check
      _
    $region27: #{gps_forward.7} parent=1 // pred_check_branch
      %27 = sbr.rel (0) target = $region29
    $region28: #{gps_forward.7} parent=1 // pred_region
      _
    $region29: #{gps_forward.7} parent=1 // pred_fallthru
      _
    // Predicated region
    $region30: #{gps_forward.7} parent=1 // pred_check
      _
    $region31: #{gps_forward.7} parent=1 // pred_check_branch
      %29 = sbr.rel (0) target = $region33
    $region32: #{gps_forward.7} parent=1 // pred_region
      _
    $region33: #{gps_forward.7} parent=1 // pred_fallthru
      _
    %v30 = vld [vmem:[%s0] sm:$0x3]
    %v31 = vld [vmem:[%s1] sm:$0xff]
    %v32 = vld [vmem:[%s1 + $0x8] sm:$0xff]
    %vm33 = vcmask 130048
    %v35 = vsel %vm33, %v30, 0
    %37 = vmatpush.msra.mxu0 0.0
    %38 = vmatpush.msra.mxu0 0.0
    %39 = vmatpush.msra.mxu0 0.0
    %40 = vmatpush.msra.mxu0 0.0
    %41 = vmatpush.msra.mxu0 0.0
    %42 = vmatpush.msra.mxu0 0.0
    %43 = vmatpush.msra.mxu0 0.0
    %44 = vmatpush.msra.mxu0 0.0
    %45 = vmatpush.msra.mxu0 0.0
    %46 = vmatpush.msra.mxu0 0.0
    %47 = vmatpush.msra.mxu0 0.0
    %48 = vmatpush.msra.mxu0 0.0
    %49 = vmatpush.msra.mxu0 0.0
    %50 = vmatpush.msra.mxu0 0.0
    %51 = vmatpush.msra.mxu0 %v32
    %52 = vmatpush.msra.mxu0 %v31
    %53 = vmatmul.f32.gmra.mxu0 %v35
    %v54 = vpop.f32.mrf.mxu0
    %v55 = vadd.f32 0.0, %v54
    %56 = vdwg.mxu0
    %v57 = vld [vmem:[%s2] sm:$0xff]
    %v58 = vld [vmem:[%s2 + $0x8] sm:$0xff]
    %v59 = vld [vmem:[%s2 + $0x10] sm:$0xff]
    %v60 = vld [vmem:[%s2 + $0x18] sm:$0xff]
    %v61 = vld [vmem:[%s3] sm:$0x1]
    %v63 = vperm.slane %v61, 0
    %vm65 = vcmask 261120
    %v67 = vsel %vm65, %v55, 0
    %69 = vmatpush.msra.mxu0 0.0
    %70 = vmatpush.msra.mxu0 0.0
    %71 = vmatpush.msra.mxu0 0.0
    %72 = vmatpush.msra.mxu0 0.0
    %73 = vmatpush.msra.mxu0 0.0
    %74 = vmatpush.msra.mxu0 0.0
    %75 = vmatpush.msra.mxu0 0.0
    %76 = vmatpush.msra.mxu0 0.0
    %77 = vmatpush.msra.mxu0 0.0
    %78 = vmatpush.msra.mxu0 0.0
    %79 = vmatpush.msra.mxu0 0.0
    %80 = vmatpush.msra.mxu0 0.0
    %81 = vmatpush.msra.mxu0 %v60
    %82 = vmatpush.msra.mxu0 %v59
    %83 = vmatpush.msra.mxu0 %v58
    %84 = vmatpush.msra.mxu0 %v57
    %85 = vmatmul.f32.gmra.mxu0 %v67
    %v86 = vpop.f32.mrf.mxu0
    %v87 = vadd.f32 %v63, %v86
    %88 = vdwg.mxu0
    %v89 = vmax.f32 %v87, 0.0
    %v90 = vld [vmem:[%s4] sm:$0xff]
    %v91 = vld [vmem:[%s4 + $0x8] sm:$0xff]
    %v92 = vld [vmem:[%s5] sm:$0x1]
    %v94 = vperm.slane %v92, 0
    %v97 = vsel %vm33, %v89, 0
    %99 = vmatpush.msra.mxu0 0.0
    %100 = vmatpush.msra.mxu0 0.0
    %101 = vmatpush.msra.mxu0 0.0
    %102 = vmatpush.msra.mxu0 0.0
    %103 = vmatpush.msra.mxu0 0.0
    %104 = vmatpush.msra.mxu0 0.0
    %105 = vmatpush.msra.mxu0 0.0
    %106 = vmatpush.msra.mxu0 0.0
    %107 = vmatpush.msra.mxu0 0.0
    %108 = vmatpush.msra.mxu0 0.0
    %109 = vmatpush.msra.mxu0 0.0
    %110 = vmatpush.msra.mxu0 0.0
    %111 = vmatpush.msra.mxu0 0.0
    %112 = vmatpush.msra.mxu0 0.0
    %113 = vmatpush.msra.mxu0 %v91
    %114 = vmatpush.msra.mxu0 %v90
    %115 = vmatmul.f32.gmra.mxu0 %v97
    %v116 = vpop.f32.mrf.mxu0
    %v117 = vadd.f32 %v94, %v116
    %118 = vdwg.mxu0
    %v119 = vmax.f32 %v117, 0.0
    %v120 = vld [vmem:[%s6] sm:$0xff]
    %v121 = vld [vmem:[%s6 + $0x8] sm:$0xff]
    %v122 = vld [vmem:[%s7] sm:$0x3]
    %v124 = vperm.slane %v122, 0
    %v125 = vperm.slane %v122, 1
    %vm128 = vcmask 64512
    %v130 = vsel %vm128, %v119, 0
    %132 = vmatpush.msra.mxu0 0.0
    %133 = vmatpush.msra.mxu0 0.0
    %134 = vmatpush.msra.mxu0 0.0
    %135 = vmatpush.msra.mxu0 0.0
    %136 = vmatpush.msra.mxu0 0.0
    %137 = vmatpush.msra.mxu0 0.0
    %138 = vmatpush.msra.mxu0 0.0
    %139 = vmatpush.msra.mxu0 0.0
    %140 = vmatpush.msra.mxu0 0.0
    %141 = vmatpush.msra.mxu0 0.0
    %142 = vmatpush.msra.mxu0 0.0
    %143 = vmatpush.msra.mxu0 0.0
    %144 = vmatpush.msra.mxu0 0.0
    %145 = vmatpush.msra.mxu0 0.0
    %146 = vmatpush.msra.mxu0 0.0
    %147 = vmatpush.msra.mxu0 %v120
    %148 = vmatmul.f32.gmra.mxu0 %v130
    %v149 = vpop.f32.mrf.mxu0
    %v150 = vadd.f32 %v124, %v149
    %151 = vdwg.mxu0
    %152 = vmatpush.msra.mxu0 0.0
    %153 = vmatpush.msra.mxu0 0.0
    %154 = vmatpush.msra.mxu0 0.0
    %155 = vmatpush.msra.mxu0 0.0
    %156 = vmatpush.msra.mxu0 0.0
    %157 = vmatpush.msra.mxu0 0.0
    %158 = vmatpush.msra.mxu0 0.0
    %159 = vmatpush.msra.mxu0 0.0
    %160 = vmatpush.msra.mxu0 0.0
    %161 = vmatpush.msra.mxu0 0.0
    %162 = vmatpush.msra.mxu0 0.0
    %163 = vmatpush.msra.mxu0 0.0
    %164 = vmatpush.msra.mxu0 0.0
    %165 = vmatpush.msra.mxu0 0.0
    %166 = vmatpush.msra.mxu0 0.0
    %167 = vmatpush.msra.mxu0 %v121
    %168 = vmatmul.f32.gmra.mxu0 %v130
    %v169 = vpop.f32.mrf.mxu0
    %v170 = vadd.f32 %v125, %v169
    %171 = vdwg.mxu0
    %v174 = vrot.slane %v170, 6
    %vm175 = vcmask 1041408
    %v176 = vsel %vm175, %v150, %v174
    %vm178 = vcmask 76802
    %vm179 = vmor %vm178, %vm175
    %180 = vst.msk [vmem:[#allocation2] sm:$0xf] %vm179, %v176
    // Predicated region
    $region34: #{gps_forward.7} parent=1 // pred_check
      _
    $region35: #{gps_forward.7} parent=1 // pred_check_branch
      %182 = sbr.rel (0) target = $region37
    $region36: #{gps_forward.7} parent=1 // pred_region
      %184 = vsyncadd [#allocation3], 0
      %s186 = sshll.u32 [#allocation2], 4
      %s187 = int_to_ptr.vmem [resolvable:$true] %s186
      %s188 = sshll.u32 %s8, 4
      %s189 = int_to_ptr.hbm [resolvable:$true] %s188
      %191 = dma.vmem_to_hbm [thread:$0]  %s187, 64, %s189, [#allocation3]
    $region37: #{gps_forward.7} parent=1 // pred_fallthru
      _
    // Predicated region
    $region38: #{gps_forward.7} parent=1 // pred_check
      _
    $region39: #{gps_forward.7} parent=1 // pred_check_branch
      %193 = sbr.rel (0) target = $region41
    $region40: #{gps_forward.7} parent=1 // pred_region
      %195 = dma.done [#allocation3], 64
    $region41: #{gps_forward.7} parent=1 // pred_fallthru
      _
    %196 = vsyncpa [#allocation3], 1

// kernel: gps_forward.5
$region0: #{gps_forward.5}
  #allocation0 [shape = 'u32[]', space=smem, size = 0x4, offset = 0x4, fixed_abs, tag = 'smem constant byte address 0x4 - core index']
  #allocation1 [shape = 'u32[72,128]{1,0:T(1,128)}', space=vmem, size = 0x9000, scoped, tag = 'internal scratch']
  %s0 = inlined_call_operand.vmem [shape: f32[16,32], index: 0, kind: input, shape index: {}]
  %s1 = inlined_call_operand.vmem [shape: f32[40,32], index: 1, kind: input, shape index: {}]
  %s2 = inlined_call_operand.vmem [shape: f32[40,16], index: 2, kind: input, shape index: {}]
  %s3 = inlined_call_operand.vmem [shape: f32[16,40], index: 3, kind: input, shape index: {}]
  %s4 = inlined_call_operand.vmem [shape: f32[16,16], index: 4, kind: input, shape index: {}]
  %s5 = inlined_call_operand.vmem [shape: f32[32,32], index: 5, kind: input, shape index: {}]
  %s6 = inlined_call_operand.vmem [shape: f32[1,32], index: 6, kind: input, shape index: {}]
  %s7 = inlined_call_operand.vmem [shape: f32[32,32], index: 7, kind: input, shape index: {}]
  %s8 = inlined_call_operand.vmem [shape: f32[1,32], index: 8, kind: input, shape index: {}]
  %s9 = inlined_call_operand.vmem [shape: f32[1,32], index: 9, kind: input, shape index: {}]
  %s10 = inlined_call_operand.vmem [shape: f32[1,32], index: 10, kind: input, shape index: {}]
  %s11 = inlined_call_operand.vmem [shape: f32[32,96], index: 11, kind: input, shape index: {}]
  %s12 = inlined_call_operand.vmem [shape: f32[1,96], index: 12, kind: input, shape index: {}]
  %s13 = inlined_call_operand.vmem [shape: f32[32,32], index: 13, kind: input, shape index: {}]
  %s14 = inlined_call_operand.vmem [shape: f32[1,32], index: 14, kind: input, shape index: {}]
  %s15 = inlined_call_operand.vmem [shape: f32[1,32], index: 15, kind: input, shape index: {}]
  %s16 = inlined_call_operand.vmem [shape: f32[1,32], index: 16, kind: input, shape index: {}]
  %s17 = inlined_call_operand.vmem [shape: f32[32,64], index: 17, kind: input, shape index: {}]
  %s18 = inlined_call_operand.vmem [shape: f32[1,64], index: 18, kind: input, shape index: {}]
  %s19 = inlined_call_operand.vmem [shape: f32[64,32], index: 19, kind: input, shape index: {}]
  %s20 = inlined_call_operand.vmem [shape: f32[1,32], index: 20, kind: input, shape index: {}]
  %s21 = inlined_call_operand.vmem [shape: f32[1,32], index: 21, kind: input, shape index: {}]
  %s22 = inlined_call_operand.vmem [shape: f32[1,32], index: 22, kind: input, shape index: {}]
  %s23 = inlined_call_operand.vmem [shape: f32[16,32], index: 23, kind: output, shape index: {}]
  %s24 = sld [smem:[#allocation0]]
  $region102: #{gps_forward.5} parent=0
    _
  %s26 = ssub.s32 1, %s24
  %s27 = scalar_select 0, %s26, %s24
  // Predicated region
  $region2: #{gps_forward.5} parent=0 // pred_check
    _
  $region3: #{gps_forward.5} parent=0 // pred_check_branch
    %29 = sbr.rel (0) target = $region5
  $region4: #{gps_forward.5} parent=0 // pred_region
    _
  $region5: #{gps_forward.5} parent=0 // pred_fallthru
    _
  // Predicated region
  $region6: #{gps_forward.5} parent=0 // pred_check
    _
  $region7: #{gps_forward.5} parent=0 // pred_check_branch
    %31 = sbr.rel (0) target = $region9
  $region8: #{gps_forward.5} parent=0 // pred_region
    _
  $region9: #{gps_forward.5} parent=0 // pred_fallthru
    _
  // Predicated region
  $region10: #{gps_forward.5} parent=0 // pred_check
    _
  $region11: #{gps_forward.5} parent=0 // pred_check_branch
    %33 = sbr.rel (0) target = $region13
  $region12: #{gps_forward.5} parent=0 // pred_region
    _
  $region13: #{gps_forward.5} parent=0 // pred_fallthru
    _
  // Predicated region
  $region14: #{gps_forward.5} parent=0 // pred_check
    _
  $region15: #{gps_forward.5} parent=0 // pred_check_branch
    %35 = sbr.rel (0) target = $region17
  $region16: #{gps_forward.5} parent=0 // pred_region
    _
  $region17: #{gps_forward.5} parent=0 // pred_fallthru
    _
  // Predicated region
  $region18: #{gps_forward.5} parent=0 // pred_check
    _
  $region19: #{gps_forward.5} parent=0 // pred_check_branch
    %37 = sbr.rel (0) target = $region21
  $region20: #{gps_forward.5} parent=0 // pred_region
    _
  $region21: #{gps_forward.5} parent=0 // pred_fallthru
    _
  // Predicated region
  $region22: #{gps_forward.5} parent=0 // pred_check
    _
  $region23: #{gps_forward.5} parent=0 // pred_check_branch
    %39 = sbr.rel (0) target = $region25
  $region24: #{gps_forward.5} parent=0 // pred_region
    _
  $region25: #{gps_forward.5} parent=0 // pred_fallthru
    _
  // Predicated region
  $region26: #{gps_forward.5} parent=0 // pred_check
    _
  $region27: #{gps_forward.5} parent=0 // pred_check_branch
    %41 = sbr.rel (0) target = $region29
  $region28: #{gps_forward.5} parent=0 // pred_region
    _
  $region29: #{gps_forward.5} parent=0 // pred_fallthru
    _
  // Predicated region
  $region30: #{gps_forward.5} parent=0 // pred_check
    _
  $region31: #{gps_forward.5} parent=0 // pred_check_branch
    %43 = sbr.rel (0) target = $region33
  $region32: #{gps_forward.5} parent=0 // pred_region
    _
  $region33: #{gps_forward.5} parent=0 // pred_fallthru
    _
  // Predicated region
  $region34: #{gps_forward.5} parent=0 // pred_check
    _
  $region35: #{gps_forward.5} parent=0 // pred_check_branch
    %45 = sbr.rel (0) target = $region37
  $region36: #{gps_forward.5} parent=0 // pred_region
    _
  $region37: #{gps_forward.5} parent=0 // pred_fallthru
    _
  // Predicated region
  $region38: #{gps_forward.5} parent=0 // pred_check
    _
  $region39: #{gps_forward.5} parent=0 // pred_check_branch
    %47 = sbr.rel (0) target = $region41
  $region40: #{gps_forward.5} parent=0 // pred_region
    _
  $region41: #{gps_forward.5} parent=0 // pred_fallthru
    _
  // Predicated region
  $region42: #{gps_forward.5} parent=0 // pred_check
    _
  $region43: #{gps_forward.5} parent=0 // pred_check_branch
    %49 = sbr.rel (0) target = $region45
  $region44: #{gps_forward.5} parent=0 // pred_region
    _
  $region45: #{gps_forward.5} parent=0 // pred_fallthru
    _
  // Predicated region
  $region46: #{gps_forward.5} parent=0 // pred_check
    _
  $region47: #{gps_forward.5} parent=0 // pred_check_branch
    %51 = sbr.rel (0) target = $region49
  $region48: #{gps_forward.5} parent=0 // pred_region
    _
  $region49: #{gps_forward.5} parent=0 // pred_fallthru
    _
  // Predicated region
  $region50: #{gps_forward.5} parent=0 // pred_check
    _
  $region51: #{gps_forward.5} parent=0 // pred_check_branch
    %53 = sbr.rel (0) target = $region53
  $region52: #{gps_forward.5} parent=0 // pred_region
    _
  $region53: #{gps_forward.5} parent=0 // pred_fallthru
    _
  // Predicated region
  $region54: #{gps_forward.5} parent=0 // pred_check
    _
  $region55: #{gps_forward.5} parent=0 // pred_check_branch
    %55 = sbr.rel (0) target = $region57
  $region56: #{gps_forward.5} parent=0 // pred_region
    _
  $region57: #{gps_forward.5} parent=0 // pred_fallthru
    _
  // Predicated region
  $region58: #{gps_forward.5} parent=0 // pred_check
    _
  $region59: #{gps_forward.5} parent=0 // pred_check_branch
    %57 = sbr.rel (0) target = $region61
  $region60: #{gps_forward.5} parent=0 // pred_region
    _
  $region61: #{gps_forward.5} parent=0 // pred_fallthru
    _
  // Predicated region
  $region62: #{gps_forward.5} parent=0 // pred_check
    _
  $region63: #{gps_forward.5} parent=0 // pred_check_branch
    %59 = sbr.rel (0) target = $region65
  $region64: #{gps_forward.5} parent=0 // pred_region
    _
  $region65: #{gps_forward.5} parent=0 // pred_fallthru
    _
  // Predicated region
  $region66: #{gps_forward.5} parent=0 // pred_check
    _
  $region67: #{gps_forward.5} parent=0 // pred_check_branch
    %61 = sbr.rel (0) target = $region69
  $region68: #{gps_forward.5} parent=0 // pred_region
    _
  $region69: #{gps_forward.5} parent=0 // pred_fallthru
    _
  // Predicated region
  $region70: #{gps_forward.5} parent=0 // pred_check
    _
  $region71: #{gps_forward.5} parent=0 // pred_check_branch
    %63 = sbr.rel (0) target = $region73
  $region72: #{gps_forward.5} parent=0 // pred_region
    _
  $region73: #{gps_forward.5} parent=0 // pred_fallthru
    _
  // Predicated region
  $region74: #{gps_forward.5} parent=0 // pred_check
    _
  $region75: #{gps_forward.5} parent=0 // pred_check_branch
    %65 = sbr.rel (0) target = $region77
  $region76: #{gps_forward.5} parent=0 // pred_region
    _
  $region77: #{gps_forward.5} parent=0 // pred_fallthru
    _
  // Predicated region
  $region78: #{gps_forward.5} parent=0 // pred_check
    _
  $region79: #{gps_forward.5} parent=0 // pred_check_branch
    %67 = sbr.rel (0) target = $region81
  $region80: #{gps_forward.5} parent=0 // pred_region
    _
  $region81: #{gps_forward.5} parent=0 // pred_fallthru
    _
  // Predicated region
  $region82: #{gps_forward.5} parent=0 // pred_check
    _
  $region83: #{gps_forward.5} parent=0 // pred_check_branch
    %69 = sbr.rel (0) target = $region85
  $region84: #{gps_forward.5} parent=0 // pred_region
    _
  $region85: #{gps_forward.5} parent=0 // pred_fallthru
    _
  // Predicated region
  $region86: #{gps_forward.5} parent=0 // pred_check
    _
  $region87: #{gps_forward.5} parent=0 // pred_check_branch
    %71 = sbr.rel (0) target = $region89
  $region88: #{gps_forward.5} parent=0 // pred_region
    _
  $region89: #{gps_forward.5} parent=0 // pred_fallthru
    _
  // Predicated region
  $region90: #{gps_forward.5} parent=0 // pred_check
    _
  $region91: #{gps_forward.5} parent=0 // pred_check_branch
    %73 = sbr.rel (0) target = $region93
  $region92: #{gps_forward.5} parent=0 // pred_region
    _
  $region93: #{gps_forward.5} parent=0 // pred_fallthru
    _
  %v74 = vld [vmem:[%s0] sm:$0xff]
  %v75 = vld [vmem:[%s0 + $0x8] sm:$0xff]
  %v76 = vld [vmem:[%s2] sm:$0xff]
  %v77 = vld [vmem:[%s2 + $0x8] sm:$0xff]
  %v78 = vld [vmem:[%s2 + $0x10] sm:$0xff]
  %v79 = vld [vmem:[%s2 + $0x18] sm:$0xff]
  %v80 = vld [vmem:[%s2 + $0x20] sm:$0xff]
  %v81 = vld [vmem:[%s1] sm:$0xff]
  %v82 = vld [vmem:[%s1 + $0x8] sm:$0xff]
  %v83 = vld [vmem:[%s1 + $0x10] sm:$0xff]
  %v84 = vld [vmem:[%s1 + $0x18] sm:$0xff]
  %v85 = vld [vmem:[%s1 + $0x20] sm:$0xff]
  %vm86 = vcmask 130048
  %v88 = vsel %vm86, %v76, 0
  %v91 = vsel %vm86, %v77, 0
  %v94 = vsel %vm86, %v78, 0
  %v97 = vsel %vm86, %v79, 0
  %v100 = vsel %vm86, %v80, 0
  %102 = vmatpush.msra.mxu0 0.0
  %103 = vmatpush.msra.mxu0 0.0
  %104 = vmatpush.msra.mxu0 0.0
  %105 = vmatpush.msra.mxu0 0.0
  %106 = vmatpush.msra.mxu0 0.0
  %107 = vmatpush.msra.mxu0 0.0
  %108 = vmatpush.msra.mxu0 0.0
  %109 = vmatpush.msra.mxu0 0.0
  %110 = vmatpush.msra.mxu0 0.0
  %111 = vmatpush.msra.mxu0 0.0
  %112 = vmatpush.msra.mxu0 0.0
  %113 = vmatpush.msra.mxu0 0.0
  %114 = vmatpush.msra.mxu0 0.0
  %115 = vmatpush.msra.mxu0 0.0
  %116 = vmatpush.msra.mxu0 %v75
  %117 = vmatpush.msra.mxu0 %v74
  %118 = vmatmul.f32.gmra.mxu0 %v88
  %v119 = vpop.f32.mrf.mxu0
  %v120 = vadd.f32 %v81, %v119
  %121 = vmatmul.f32.gmra.mxu0 %v91
  %v122 = vpop.f32.mrf.mxu0
  %v123 = vadd.f32 %v82, %v122
  %124 = vmatmul.f32.gmra.mxu0 %v94
  %v125 = vpop.f32.mrf.mxu0
  %v126 = vadd.f32 %v83, %v125
  %127 = vmatmul.f32.gmra.mxu0 %v97
  %v128 = vpop.f32.mrf.mxu0
  %v129 = vadd.f32 %v84, %v128
  %130 = vmatmul.f32.gmra.mxu0 %v100
  %v131 = vpop.f32.mrf.mxu0
  %v132 = vadd.f32 %v85, %v131
  %133 = vdwg.mxu0
  %v134 = vmax.f32 %v120, 0.0
  %v135 = vmax.f32 %v123, 0.0
  %v136 = vmax.f32 %v126, 0.0
  %v137 = vmax.f32 %v129, 0.0
  %v138 = vmax.f32 %v132, 0.0
  %v139 = vld [vmem:[%s3] sm:$0xff]
  %v140 = vld [vmem:[%s3 + $0x8] sm:$0xff]
  %vm141 = vcmask 326656
  %v143 = vsel %vm141, %v139, 0
  %v146 = vsel %vm141, %v140, 0
  %148 = vmatpush.msra.mxu0 0.0
  %149 = vmatpush.msra.mxu0 0.0
  %150 = vmatpush.msra.mxu0 0.0
  %151 = vmatpush.msra.mxu0 0.0
  %152 = vmatpush.msra.mxu0 0.0
  %153 = vmatpush.msra.mxu0 0.0
  %154 = vmatpush.msra.mxu0 0.0
  %155 = vmatpush.msra.mxu0 0.0
  %156 = vmatpush.msra.mxu0 0.0
  %157 = vmatpush.msra.mxu0 0.0
  %158 = vmatpush.msra.mxu0 0.0
  %159 = vmatpush.msra.mxu0 %v138
  %160 = vmatpush.msra.mxu0 %v137
  %161 = vmatpush.msra.mxu0 %v136
  %162 = vmatpush.msra.mxu0 %v135
  %163 = vmatpush.msra.mxu0 %v134
  %164 = vmatmul.f32.gmra.mxu0 %v143
  %v165 = vpop.f32.mrf.mxu0
  %v166 = vadd.f32 %v74, %v165
  %167 = vmatmul.f32.gmra.mxu0 %v146
  %v168 = vpop.f32.mrf.mxu0
  %v169 = vadd.f32 %v75, %v168
  %170 = vdwg.mxu0
  %v171 = vld [vmem:[%s5] sm:$0xff]
  %v172 = vld [vmem:[%s5 + $0x8] sm:$0xff]
  %v173 = vld [vmem:[%s5 + $0x10] sm:$0xff]
  %v174 = vld [vmem:[%s5 + $0x18] sm:$0xff]
  %v175 = vld [vmem:[%s6] sm:$0x1]
  %v177 = vperm.slane %v175, 0
  %vm179 = vcmask 261120
  %v181 = vsel %vm179, %v166, 0
  %v184 = vsel %vm179, %v169, 0
  %186 = vmatpush.msra.mxu0 0.0
  %187 = vmatpush.msra.mxu0 0.0
  %188 = vmatpush.msra.mxu0 0.0
  %189 = vmatpush.msra.mxu0 0.0
  %190 = vmatpush.msra.mxu0 0.0
  %191 = vmatpush.msra.mxu0 0.0
  %192 = vmatpush.msra.mxu0 0.0
  %193 = vmatpush.msra.mxu0 0.0
  %194 = vmatpush.msra.mxu0 0.0
  %195 = vmatpush.msra.mxu0 0.0
  %196 = vmatpush.msra.mxu0 0.0
  %197 = vmatpush.msra.mxu0 0.0
  %198 = vmatpush.msra.mxu0 %v174
  %199 = vmatpush.msra.mxu0 %v173
  %200 = vmatpush.msra.mxu0 %v172
  %201 = vmatpush.msra.mxu0 %v171
  %202 = vmatmul.f32.gmra.mxu0 %v181
  %v203 = vpop.f32.mrf.mxu0
  %v204 = vadd.f32 %v177, %v203
  %205 = vmatmul.f32.gmra.mxu0 %v184
  %v206 = vpop.f32.mrf.mxu0
  %v207 = vadd.f32 %v177, %v206
  %208 = vdwg.mxu0
  %v209 = vmax.f32 %v204, 0.0
  %v210 = vmax.f32 %v207, 0.0
  %v211 = vld [vmem:[%s7] sm:$0xff]
  %v212 = vld [vmem:[%s7 + $0x8] sm:$0xff]
  %v213 = vld [vmem:[%s7 + $0x10] sm:$0xff]
  %v214 = vld [vmem:[%s7 + $0x18] sm:$0xff]
  %v215 = vld [vmem:[%s8] sm:$0x1]
  %v217 = vperm.slane %v215, 0
  %v220 = vsel %vm179, %v209, 0
  %v223 = vsel %vm179, %v210, 0
  %225 = vmatpush.msra.mxu0 0.0
  %226 = vmatpush.msra.mxu0 0.0
  %227 = vmatpush.msra.mxu0 0.0
  %228 = vmatpush.msra.mxu0 0.0
  %229 = vmatpush.msra.mxu0 0.0
  %230 = vmatpush.msra.mxu0 0.0
  %231 = vmatpush.msra.mxu0 0.0
  %232 = vmatpush.msra.mxu0 0.0
  %233 = vmatpush.msra.mxu0 0.0
  %234 = vmatpush.msra.mxu0 0.0
  %235 = vmatpush.msra.mxu0 0.0
  %236 = vmatpush.msra.mxu0 0.0
  %237 = vmatpush.msra.mxu0 %v214
  %238 = vmatpush.msra.mxu0 %v213
  %239 = vmatpush.msra.mxu0 %v212
  %240 = vmatpush.msra.mxu0 %v211
  %241 = vmatmul.f32.gmra.mxu0 %v220
  %v242 = vpop.f32.mrf.mxu0
  %v243 = vadd.f32 %v217, %v242
  %244 = vmatmul.f32.gmra.mxu0 %v223
  %v245 = vpop.f32.mrf.mxu0
  %v246 = vadd.f32 %v217, %v245
  %247 = vdwg.mxu0
  %v248 = vadd.f32 %v243, %v74
  %v249 = vadd.f32 %v246, %v75
  %v250 = vld [vmem:[%s9] sm:$0x1]
  %v252 = vperm.slane %v250, 0
  %v254 = vmul.f32 %v248, %v252
  %v255 = vmul.f32 %v249, %v252
  %v256 = vld [vmem:[%s10] sm:$0x1]
  %v258 = vperm.slane %v256, 0
  %v260 = vadd.f32 %v254, %v258
  %v261 = vadd.f32 %v255, %v258
  %v262 = vld [vmem:[%s11] sm:$0xff]
  %v263 = vld [vmem:[%s11 + $0x8] sm:$0xff]
  %v264 = vld [vmem:[%s11 + $0x10] sm:$0xff]
  %v265 = vld [vmem:[%s11 + $0x18] sm:$0xff]
  %v266 = vld [vmem:[%s12] sm:$0x1]
  %v268 = vperm.slane %v266, 0
  %v271 = vsel %vm179, %v74, 0
  %v274 = vsel %vm179, %v75, 0
  %276 = vmatpush.msra.mxu0 0.0
  %277 = vmatpush.msra.mxu0 0.0
  %278 = vmatpush.msra.mxu0 0.0
  %279 = vmatpush.msra.mxu0 0.0
  %280 = vmatpush.msra.mxu0 0.0
  %281 = vmatpush.msra.mxu0 0.0
  %282 = vmatpush.msra.mxu0 0.0
  %283 = vmatpush.msra.mxu0 0.0
  %284 = vmatpush.msra.mxu0 0.0
  %285 = vmatpush.msra.mxu0 0.0
  %286 = vmatpush.msra.mxu0 0.0
  %287 = vmatpush.msra.mxu0 0.0
  %288 = vmatpush.msra.mxu0 %v265
  %289 = vmatpush.msra.mxu0 %v264
  %290 = vmatpush.msra.mxu0 %v263
  %291 = vmatpush.msra.mxu0 %v262
  %292 = vmatmul.f32.gmra.mxu0 %v271
  %v293 = vpop.f32.mrf.mxu0
  %v294 = vadd.f32 %v268, %v293
  %295 = vmatmul.f32.gmra.mxu0 %v274
  %v296 = vpop.f32.mrf.mxu0
  %v297 = vadd.f32 %v268, %v296
  %298 = vdwg.mxu0
  %v299 = vld [vmem:[%s4] sm:$0xff]
  %v300 = vld [vmem:[%s4 + $0x8] sm:$0xff]
  %v301 = vld [vmem:[%s13] sm:$0xff]
  %v302 = vld [vmem:[%s13 + $0x8] sm:$0xff]
  %v303 = vld [vmem:[%s13 + $0x10] sm:$0xff]
  %v304 = vld [vmem:[%s13 + $0x18] sm:$0xff]
  %307 = vrot.lane.b32.xlu0 %v294, 96
  %v308 = vpop.permute.xlu0 %307
  %309 = vrot.lane.b32.xlu0 %v297, 96
  %v310 = vpop.permute.xlu0 %309
  %vm311 = vcmask 64512
  %v312 = vsel %vm311, %v294, 0
  %v314 = vsel %vm311, %v297, 0
  %v316 = vsel %vm311, %v308, 0
  %v318 = vsel %vm311, %v310, 0
  %320 = vmatpush.xpose.msra.mxu0 0.0
  %321 = vmatpush.xpose.msra.mxu0 0.0
  %322 = vmatpush.xpose.msra.mxu0 0.0
  %323 = vmatpush.xpose.msra.mxu0 0.0
  %324 = vmatpush.xpose.msra.mxu0 0.0
  %325 = vmatpush.xpose.msra.mxu0 0.0
  %326 = vmatpush.xpose.msra.mxu0 0.0
  %327 = vmatpush.xpose.msra.mxu0 0.0
  %328 = vmatpush.xpose.msra.mxu0 0.0
  %329 = vmatpush.xpose.msra.mxu0 0.0
  %330 = vmatpush.xpose.msra.mxu0 0.0
  %331 = vmatpush.xpose.msra.mxu0 0.0
  %332 = vmatpush.xpose.msra.mxu0 0.0
  %333 = vmatpush.xpose.msra.mxu0 0.0
  %334 = vmatpush.xpose.msra.mxu0 %v318
  %335 = vmatpush.xpose.msra.mxu0 %v316
  %336 = vmatmul.f32.gmra.mxu0 %v312
  %v337 = vpop.f32.mrf.mxu0
  %v338 = vadd.f32 0.0, %v337
  %339 = vmatmul.f32.gmra.mxu0 %v314
  %v340 = vpop.f32.mrf.mxu0
  %v341 = vadd.f32 0.0, %v340
  %342 = vdwg.mxu0
  %v343 = vmul.f32 %v338, 0.35355338
  %v344 = vmul.f32 %v341, 0.35355338
  %v345 = vadd.f32 %v343, %v299
  %v346 = vadd.f32 %v344, %v300
  %v347 = vsel %vm86, %v345, -inf
  %348 = vmax.xlane.f32.xlu0 %v347
  %v349 = vpop.xlane.xlu0 %348
  %v350 = vsel %vm86, %v346, -inf
  %351 = vmax.xlane.f32.xlu0 %v350
  %v352 = vpop.xlane.xlu0 %351
  %v353 = vsub.f32 %v345, %v349
  %v354 = vsub.f32 %v346, %v352
  %v355 = vmul.f32 %v353, 1.442695
  %v356 = vpow.pop %v355
  %v357 = vmul.f32 %v354, 1.442695
  %v358 = vpow.pop %v357
  %v359 = vsel %vm86, %v356, 0.0
  %360 = vadd.xlane.f32.xlu0 %v359
  %v361 = vpop.xlane.xlu0 %360
  %v362 = vsel %vm86, %v358, 0.0
  %363 = vadd.xlane.f32.xlu0 %v362
  %v364 = vpop.xlane.xlu0 %363
  %v365 = vrcp.pop %v361
  %v366 = vrcp.pop %v364
  %v367 = vmul.f32 %v356, %v365
  %v368 = vmul.f32 %v358, %v366
  %369 = vrot.lane.b32.xlu0 %v294, 64
  %v370 = vpop.permute.xlu0 %369
  %371 = vrot.lane.b32.xlu0 %v297, 64
  %v372 = vpop.permute.xlu0 %371
  %v376 = vsel %vm86, %v367, 0
  %v379 = vsel %vm86, %v368, 0
  %381 = vmatpush.msra.mxu0 0.0
  %382 = vmatpush.msra.mxu0 0.0
  %383 = vmatpush.msra.mxu0 0.0
  %384 = vmatpush.msra.mxu0 0.0
  %385 = vmatpush.msra.mxu0 0.0
  %386 = vmatpush.msra.mxu0 0.0
  %387 = vmatpush.msra.mxu0 0.0
  %388 = vmatpush.msra.mxu0 0.0
  %389 = vmatpush.msra.mxu0 0.0
  %390 = vmatpush.msra.mxu0 0.0
  %391 = vmatpush.msra.mxu0 0.0
  %392 = vmatpush.msra.mxu0 0.0
  %393 = vmatpush.msra.mxu0 0.0
  %394 = vmatpush.msra.mxu0 0.0
  %395 = vmatpush.msra.mxu0 %v372
  %396 = vmatpush.msra.mxu0 %v370
  %397 = vmatmul.f32.gmra.mxu0 %v376
  %v398 = vpop.f32.mrf.mxu0
  %v399 = vadd.f32 0.0, %v398
  %400 = vmatmul.f32.gmra.mxu0 %v379
  %v401 = vpop.f32.mrf.mxu0
  %v402 = vadd.f32 0.0, %v401
  %403 = vdwg.mxu0
  %404 = vrot.lane.b32.xlu0 %v294, 120
  %v405 = vpop.permute.xlu0 %404
  %406 = vrot.lane.b32.xlu0 %v297, 120
  %v407 = vpop.permute.xlu0 %406
  %408 = vrot.lane.b32.xlu0 %v294, 88
  %v409 = vpop.permute.xlu0 %408
  %410 = vrot.lane.b32.xlu0 %v297, 88
  %v411 = vpop.permute.xlu0 %410
  %v412 = vsel %vm311, %v405, 0
  %v414 = vsel %vm311, %v407, 0
  %v416 = vsel %vm311, %v409, 0
  %v418 = vsel %vm311, %v411, 0
  %420 = vmatpush.xpose.msra.mxu0 0.0
  %421 = vmatpush.xpose.msra.mxu0 0.0
  %422 = vmatpush.xpose.msra.mxu0 0.0
  %423 = vmatpush.xpose.msra.mxu0 0.0
  %424 = vmatpush.xpose.msra.mxu0 0.0
  %425 = vmatpush.xpose.msra.mxu0 0.0
  %426 = vmatpush.xpose.msra.mxu0 0.0
  %427 = vmatpush.xpose.msra.mxu0 0.0
  %428 = vmatpush.xpose.msra.mxu0 0.0
  %429 = vmatpush.xpose.msra.mxu0 0.0
  %430 = vmatpush.xpose.msra.mxu0 0.0
  %431 = vmatpush.xpose.msra.mxu0 0.0
  %432 = vmatpush.xpose.msra.mxu0 0.0
  %433 = vmatpush.xpose.msra.mxu0 0.0
  %434 = vmatpush.xpose.msra.mxu0 %v418
  %435 = vmatpush.xpose.msra.mxu0 %v416
  %436 = vmatmul.f32.gmra.mxu0 %v412
  %v437 = vpop.f32.mrf.mxu0
  %v438 = vadd.f32 0.0, %v437
  %439 = vmatmul.f32.gmra.mxu0 %v414
  %v440 = vpop.f32.mrf.mxu0
  %v441 = vadd.f32 0.0, %v440
  %442 = vdwg.mxu0
  %v443 = vmul.f32 %v438, 0.35355338
  %v444 = vmul.f32 %v441, 0.35355338
  %v445 = vadd.f32 %v443, %v299
  %v446 = vadd.f32 %v444, %v300
  %v447 = vsel %vm86, %v445, -inf
  %448 = vmax.xlane.f32.xlu0 %v447
  %v449 = vpop.xlane.xlu0 %448
  %v450 = vsel %vm86, %v446, -inf
  %451 = vmax.xlane.f32.xlu0 %v450
  %v452 = vpop.xlane.xlu0 %451
  %v453 = vsub.f32 %v445, %v449
  %v454 = vsub.f32 %v446, %v452
  %v455 = vmul.f32 %v453, 1.442695
  %v456 = vpow.pop %v455
  %v457 = vmul.f32 %v454, 1.442695
  %v458 = vpow.pop %v457
  %v459 = vsel %vm86, %v456, 0.0
  %460 = vadd.xlane.f32.xlu0 %v459
  %v461 = vpop.xlane.xlu0 %460
  %v462 = vsel %vm86, %v458, 0.0
  %463 = vadd.xlane.f32.xlu0 %v462
  %v464 = vpop.xlane.xlu0 %463
  %v465 = vrcp.pop %v461
  %v466 = vrcp.pop %v464
  %v467 = vmul.f32 %v456, %v465
  %v468 = vmul.f32 %v458, %v466
  %469 = vrot.lane.b32.xlu0 %v294, 56
  %v470 = vpop.permute.xlu0 %469
  %471 = vrot.lane.b32.xlu0 %v297, 56
  %v472 = vpop.permute.xlu0 %471
  %v476 = vsel %vm86, %v467, 0
  %v479 = vsel %vm86, %v468, 0
  %481 = vmatpush.msra.mxu0 0.0
  %482 = vmatpush.msra.mxu0 0.0
  %483 = vmatpush.msra.mxu0 0.0
  %484 = vmatpush.msra.mxu0 0.0
  %485 = vmatpush.msra.mxu0 0.0
  %486 = vmatpush.msra.mxu0 0.0
  %487 = vmatpush.msra.mxu0 0.0
  %488 = vmatpush.msra.mxu0 0.0
  %489 = vmatpush.msra.mxu0 0.0
  %490 = vmatpush.msra.mxu0 0.0
  %491 = vmatpush.msra.mxu0 0.0
  %492 = vmatpush.msra.mxu0 0.0
  %493 = vmatpush.msra.mxu0 0.0
  %494 = vmatpush.msra.mxu0 0.0
  %495 = vmatpush.msra.mxu0 %v472
  %496 = vmatpush.msra.mxu0 %v470
  %497 = vmatmul.f32.gmra.mxu0 %v476
  %v498 = vpop.f32.mrf.mxu0
  %v499 = vadd.f32 0.0, %v498
  %500 = vmatmul.f32.gmra.mxu0 %v479
  %v501 = vpop.f32.mrf.mxu0
  %v502 = vadd.f32 0.0, %v501
  %503 = vdwg.mxu0
  %v505 = vsel %vm311, %v499, 0
  %v508 = vsel %vm311, %v502, 0
  %510 = vmatpush.msra.mxu0 0.0
  %511 = vmatpush.msra.mxu0 0.0
  %512 = vmatpush.msra.mxu0 0.0
  %513 = vmatpush.msra.mxu0 0.0
  %514 = vmatpush.msra.mxu0 0.0
  %515 = vmatpush.msra.mxu0 0.0
  %516 = vmatpush.msra.mxu0 0.0
  %517 = vmatpush.msra.mxu0 0.0
  %518 = vmatpush.msra.mxu0 0.0
  %519 = vmatpush.msra.mxu0 0.0
  %520 = vmatpush.msra.mxu0 0.0
  %521 = vmatpush.msra.mxu0 0.0
  %522 = vmatpush.msra.mxu0 0.0
  %523 = vmatpush.msra.mxu0 0.0
  %524 = vmatpush.msra.mxu0 0.0
  %525 = vmatpush.msra.mxu0 %v302
  %526 = vmatmul.f32.gmra.mxu0 %v505
  %v527 = vpop.f32.mrf.mxu0
  %v528 = vadd.f32 0.0, %v527
  %529 = vmatmul.f32.gmra.mxu0 %v508
  %v530 = vpop.f32.mrf.mxu0
  %v531 = vadd.f32 0.0, %v530
  %532 = vdwg.mxu0
  %v534 = vsel %vm311, %v399, 0
  %v537 = vsel %vm311, %v402, 0
  %539 = vmatpush.msra.mxu0 0.0
  %540 = vmatpush.msra.mxu0 0.0
  %541 = vmatpush.msra.mxu0 0.0
  %542 = vmatpush.msra.mxu0 0.0
  %543 = vmatpush.msra.mxu0 0.0
  %544 = vmatpush.msra.mxu0 0.0
  %545 = vmatpush.msra.mxu0 0.0
  %546 = vmatpush.msra.mxu0 0.0
  %547 = vmatpush.msra.mxu0 0.0
  %548 = vmatpush.msra.mxu0 0.0
  %549 = vmatpush.msra.mxu0 0.0
  %550 = vmatpush.msra.mxu0 0.0
  %551 = vmatpush.msra.mxu0 0.0
  %552 = vmatpush.msra.mxu0 0.0
  %553 = vmatpush.msra.mxu0 0.0
  %554 = vmatpush.msra.mxu0 %v301
  %555 = vmatmul.f32.gmra.mxu0 %v534
  %v556 = vpop.f32.mrf.mxu0
  %v557 = vadd.f32 %v528, %v556
  %558 = vmatmul.f32.gmra.mxu0 %v537
  %v559 = vpop.f32.mrf.mxu0
  %v560 = vadd.f32 %v531, %v559
  %561 = vdwg.mxu0
  %562 = vrot.lane.b32.xlu0 %v294, 112
  %v563 = vpop.permute.xlu0 %562
  %564 = vrot.lane.b32.xlu0 %v297, 112
  %v565 = vpop.permute.xlu0 %564
  %566 = vrot.lane.b32.xlu0 %v294, 80
  %v567 = vpop.permute.xlu0 %566
  %568 = vrot.lane.b32.xlu0 %v297, 80
  %v569 = vpop.permute.xlu0 %568
  %v570 = vsel %vm311, %v563, 0
  %v572 = vsel %vm311, %v565, 0
  %v574 = vsel %vm311, %v567, 0
  %v576 = vsel %vm311, %v569, 0
  %578 = vmatpush.xpose.msra.mxu0 0.0
  %579 = vmatpush.xpose.msra.mxu0 0.0
  %580 = vmatpush.xpose.msra.mxu0 0.0
  %581 = vmatpush.xpose.msra.mxu0 0.0
  %582 = vmatpush.xpose.msra.mxu0 0.0
  %583 = vmatpush.xpose.msra.mxu0 0.0
  %584 = vmatpush.xpose.msra.mxu0 0.0
  %585 = vmatpush.xpose.msra.mxu0 0.0
  %586 = vmatpush.xpose.msra.mxu0 0.0
  %587 = vmatpush.xpose.msra.mxu0 0.0
  %588 = vmatpush.xpose.msra.mxu0 0.0
  %589 = vmatpush.xpose.msra.mxu0 0.0
  %590 = vmatpush.xpose.msra.mxu0 0.0
  %591 = vmatpush.xpose.msra.mxu0 0.0
  %592 = vmatpush.xpose.msra.mxu0 %v576
  %593 = vmatpush.xpose.msra.mxu0 %v574
  %594 = vmatmul.f32.gmra.mxu0 %v570
  %v595 = vpop.f32.mrf.mxu0
  %v596 = vadd.f32 0.0, %v595
  %597 = vmatmul.f32.gmra.mxu0 %v572
  %v598 = vpop.f32.mrf.mxu0
  %v599 = vadd.f32 0.0, %v598
  %600 = vdwg.mxu0
  %v601 = vmul.f32 %v596, 0.35355338
  %v602 = vmul.f32 %v599, 0.35355338
  %v603 = vadd.f32 %v601, %v299
  %v604 = vadd.f32 %v602, %v300
  %v605 = vsel %vm86, %v603, -inf
  %606 = vmax.xlane.f32.xlu0 %v605
  %v607 = vpop.xlane.xlu0 %606
  %v608 = vsel %vm86, %v604, -inf
  %609 = vmax.xlane.f32.xlu0 %v608
  %v610 = vpop.xlane.xlu0 %609
  %v611 = vsub.f32 %v603, %v607
  %v612 = vsub.f32 %v604, %v610
  %v613 = vmul.f32 %v611, 1.442695
  %v614 = vpow.pop %v613
  %v615 = vmul.f32 %v612, 1.442695
  %v616 = vpow.pop %v615
  %v617 = vsel %vm86, %v614, 0.0
  %618 = vadd.xlane.f32.xlu0 %v617
  %v619 = vpop.xlane.xlu0 %618
  %v620 = vsel %vm86, %v616, 0.0
  %621 = vadd.xlane.f32.xlu0 %v620
  %v622 = vpop.xlane.xlu0 %621
  %v623 = vrcp.pop %v619
  %v624 = vrcp.pop %v622
  %v625 = vmul.f32 %v614, %v623
  %v626 = vmul.f32 %v616, %v624
  %627 = vrot.lane.b32.xlu0 %v294, 48
  %v628 = vpop.permute.xlu0 %627
  %629 = vrot.lane.b32.xlu0 %v297, 48
  %v630 = vpop.permute.xlu0 %629
  %v634 = vsel %vm86, %v625, 0
  %v637 = vsel %vm86, %v626, 0
  %639 = vmatpush.msra.mxu0 0.0
  %640 = vmatpush.msra.mxu0 0.0
  %641 = vmatpush.msra.mxu0 0.0
  %642 = vmatpush.msra.mxu0 0.0
  %643 = vmatpush.msra.mxu0 0.0
  %644 = vmatpush.msra.mxu0 0.0
  %645 = vmatpush.msra.mxu0 0.0
  %646 = vmatpush.msra.mxu0 0.0
  %647 = vmatpush.msra.mxu0 0.0
  %648 = vmatpush.msra.mxu0 0.0
  %649 = vmatpush.msra.mxu0 0.0
  %650 = vmatpush.msra.mxu0 0.0
  %651 = vmatpush.msra.mxu0 0.0
  %652 = vmatpush.msra.mxu0 0.0
  %653 = vmatpush.msra.mxu0 %v630
  %654 = vmatpush.msra.mxu0 %v628
  %655 = vmatmul.f32.gmra.mxu0 %v634
  %v656 = vpop.f32.mrf.mxu0
  %v657 = vadd.f32 0.0, %v656
  %658 = vmatmul.f32.gmra.mxu0 %v637
  %v659 = vpop.f32.mrf.mxu0
  %v660 = vadd.f32 0.0, %v659
  %661 = vdwg.mxu0
  %v663 = vsel %vm311, %v657, 0
  %v666 = vsel %vm311, %v660, 0
  %668 = vmatpush.msra.mxu0 0.0
  %669 = vmatpush.msra.mxu0 0.0
  %670 = vmatpush.msra.mxu0 0.0
  %671 = vmatpush.msra.mxu0 0.0
  %672 = vmatpush.msra.mxu0 0.0
  %673 = vmatpush.msra.mxu0 0.0
  %674 = vmatpush.msra.mxu0 0.0
  %675 = vmatpush.msra.mxu0 0.0
  %676 = vmatpush.msra.mxu0 0.0
  %677 = vmatpush.msra.mxu0 0.0
  %678 = vmatpush.msra.mxu0 0.0
  %679 = vmatpush.msra.mxu0 0.0
  %680 = vmatpush.msra.mxu0 0.0
  %681 = vmatpush.msra.mxu0 0.0
  %682 = vmatpush.msra.mxu0 0.0
  %683 = vmatpush.msra.mxu0 %v303
  %684 = vmatmul.f32.gmra.mxu0 %v663
  %v685 = vpop.f32.mrf.mxu0
  %v686 = vadd.f32 0.0, %v685
  %687 = vmatmul.f32.gmra.mxu0 %v666
  %v688 = vpop.f32.mrf.mxu0
  %v689 = vadd.f32 0.0, %v688
  %690 = vdwg.mxu0
  %v691 = vadd.f32 %v557, %v686
  %v692 = vadd.f32 %v560, %v689
  %693 = vrot.lane.b32.xlu0 %v294, 104
  %v694 = vpop.permute.xlu0 %693
  %695 = vrot.lane.b32.xlu0 %v297, 104
  %v696 = vpop.permute.xlu0 %695
  %697 = vrot.lane.b32.xlu0 %v294, 72
  %v698 = vpop.permute.xlu0 %697
  %699 = vrot.lane.b32.xlu0 %v297, 72
  %v700 = vpop.permute.xlu0 %699
  %v701 = vsel %vm311, %v694, 0
  %v703 = vsel %vm311, %v696, 0
  %v705 = vsel %vm311, %v698, 0
  %v707 = vsel %vm311, %v700, 0
  %709 = vmatpush.xpose.msra.mxu0 0.0
  %710 = vmatpush.xpose.msra.mxu0 0.0
  %711 = vmatpush.xpose.msra.mxu0 0.0
  %712 = vmatpush.xpose.msra.mxu0 0.0
  %713 = vmatpush.xpose.msra.mxu0 0.0
  %714 = vmatpush.xpose.msra.mxu0 0.0
  %715 = vmatpush.xpose.msra.mxu0 0.0
  %716 = vmatpush.xpose.msra.mxu0 0.0
  %717 = vmatpush.xpose.msra.mxu0 0.0
  %718 = vmatpush.xpose.msra.mxu0 0.0
  %719 = vmatpush.xpose.msra.mxu0 0.0
  %720 = vmatpush.xpose.msra.mxu0 0.0
  %721 = vmatpush.xpose.msra.mxu0 0.0
  %722 = vmatpush.xpose.msra.mxu0 0.0
  %723 = vmatpush.xpose.msra.mxu0 %v707
  %724 = vmatpush.xpose.msra.mxu0 %v705
  %725 = vmatmul.f32.gmra.mxu0 %v701
  %v726 = vpop.f32.mrf.mxu0
  %v727 = vadd.f32 0.0, %v726
  %728 = vmatmul.f32.gmra.mxu0 %v703
  %v729 = vpop.f32.mrf.mxu0
  %v730 = vadd.f32 0.0, %v729
  %731 = vdwg.mxu0
  %v732 = vmul.f32 %v727, 0.35355338
  %v733 = vmul.f32 %v730, 0.35355338
  %v734 = vadd.f32 %v732, %v299
  %v735 = vadd.f32 %v733, %v300
  %v736 = vsel %vm86, %v734, -inf
  %737 = vmax.xlane.f32.xlu0 %v736
  %v738 = vpop.xlane.xlu0 %737
  %v739 = vsel %vm86, %v735, -inf
  %740 = vmax.xlane.f32.xlu0 %v739
  %v741 = vpop.xlane.xlu0 %740
  %v742 = vsub.f32 %v734, %v738
  %v743 = vsub.f32 %v735, %v741
  %v744 = vmul.f32 %v742, 1.442695
  %v745 = vpow.pop %v744
  %v746 = vmul.f32 %v743, 1.442695
  %v747 = vpow.pop %v746
  %v748 = vsel %vm86, %v745, 0.0
  %749 = vadd.xlane.f32.xlu0 %v748
  %v750 = vpop.xlane.xlu0 %749
  %v751 = vsel %vm86, %v747, 0.0
  %752 = vadd.xlane.f32.xlu0 %v751
  %v753 = vpop.xlane.xlu0 %752
  %v754 = vrcp.pop %v750
  %v755 = vrcp.pop %v753
  %v756 = vmul.f32 %v745, %v754
  %v757 = vmul.f32 %v747, %v755
  %758 = vrot.lane.b32.xlu0 %v294, 40
  %v759 = vpop.permute.xlu0 %758
  %760 = vrot.lane.b32.xlu0 %v297, 40
  %v761 = vpop.permute.xlu0 %760
  %v765 = vsel %vm86, %v756, 0
  %v768 = vsel %vm86, %v757, 0
  %770 = vmatpush.msra.mxu0 0.0
  %771 = vmatpush.msra.mxu0 0.0
  %772 = vmatpush.msra.mxu0 0.0
  %773 = vmatpush.msra.mxu0 0.0
  %774 = vmatpush.msra.mxu0 0.0
  %775 = vmatpush.msra.mxu0 0.0
  %776 = vmatpush.msra.mxu0 0.0
  %777 = vmatpush.msra.mxu0 0.0
  %778 = vmatpush.msra.mxu0 0.0
  %779 = vmatpush.msra.mxu0 0.0
  %780 = vmatpush.msra.mxu0 0.0
  %781 = vmatpush.msra.mxu0 0.0
  %782 = vmatpush.msra.mxu0 0.0
  %783 = vmatpush.msra.mxu0 0.0
  %784 = vmatpush.msra.mxu0 %v761
  %785 = vmatpush.msra.mxu0 %v759
  %786 = vmatmul.f32.gmra.mxu0 %v765
  %v787 = vpop.f32.mrf.mxu0
  %v788 = vadd.f32 0.0, %v787
  %789 = vmatmul.f32.gmra.mxu0 %v768
  %v790 = vpop.f32.mrf.mxu0
  %v791 = vadd.f32 0.0, %v790
  %792 = vdwg.mxu0
  %v794 = vsel %vm311, %v788, 0
  %v797 = vsel %vm311, %v791, 0
  %799 = vmatpush.msra.mxu0 0.0
  %800 = vmatpush.msra.mxu0 0.0
  %801 = vmatpush.msra.mxu0 0.0
  %802 = vmatpush.msra.mxu0 0.0
  %803 = vmatpush.msra.mxu0 0.0
  %804 = vmatpush.msra.mxu0 0.0
  %805 = vmatpush.msra.mxu0 0.0
  %806 = vmatpush.msra.mxu0 0.0
  %807 = vmatpush.msra.mxu0 0.0
  %808 = vmatpush.msra.mxu0 0.0
  %809 = vmatpush.msra.mxu0 0.0
  %810 = vmatpush.msra.mxu0 0.0
  %811 = vmatpush.msra.mxu0 0.0
  %812 = vmatpush.msra.mxu0 0.0
  %813 = vmatpush.msra.mxu0 0.0
  %814 = vmatpush.msra.mxu0 %v304
  %815 = vmatmul.f32.gmra.mxu0 %v794
  %v816 = vpop.f32.mrf.mxu0
  %v817 = vadd.f32 0.0, %v816
  %818 = vmatmul.f32.gmra.mxu0 %v797
  %v819 = vpop.f32.mrf.mxu0
  %v820 = vadd.f32 0.0, %v819
  %821 = vdwg.mxu0
  %v822 = vadd.f32 %v691, %v817
  %v823 = vadd.f32 %v692, %v820
  %v824 = vld [vmem:[%s14] sm:$0x1]
  %v826 = vperm.slane %v824, 0
  %v828 = vadd.f32 %v822, %v826
  %v829 = vadd.f32 %v823, %v826
  %v830 = vadd.f32 %v828, %v74
  %v831 = vadd.f32 %v829, %v75
  %v832 = vld [vmem:[%s15] sm:$0x1]
  %v834 = vperm.slane %v832, 0
  %v836 = vmul.f32 %v830, %v834
  %v837 = vmul.f32 %v831, %v834
  %v838 = vld [vmem:[%s16] sm:$0x1]
  %v840 = vperm.slane %v838, 0
  %v842 = vadd.f32 %v836, %v840
  %v843 = vadd.f32 %v837, %v840
  %v844 = vadd.f32 %v260, %v842
  %v845 = vadd.f32 %v261, %v843
  %v846 = vld [vmem:[%s17] sm:$0xff]
  %v847 = vld [vmem:[%s17 + $0x8] sm:$0xff]
  %v848 = vld [vmem:[%s17 + $0x10] sm:$0xff]
  %v849 = vld [vmem:[%s17 + $0x18] sm:$0xff]
  %v850 = vld [vmem:[%s18] sm:$0x1]
  %v852 = vperm.slane %v850, 0
  %v855 = vsel %vm179, %v844, 0
  %v858 = vsel %vm179, %v845, 0
  %860 = vmatpush.msra.mxu0 0.0
  %861 = vmatpush.msra.mxu0 0.0
  %862 = vmatpush.msra.mxu0 0.0
  %863 = vmatpush.msra.mxu0 0.0
  %864 = vmatpush.msra.mxu0 0.0
  %865 = vmatpush.msra.mxu0 0.0
  %866 = vmatpush.msra.mxu0 0.0
  %867 = vmatpush.msra.mxu0 0.0
  %868 = vmatpush.msra.mxu0 0.0
  %869 = vmatpush.msra.mxu0 0.0
  %870 = vmatpush.msra.mxu0 0.0
  %871 = vmatpush.msra.mxu0 0.0
  %872 = vmatpush.msra.mxu0 %v849
  %873 = vmatpush.msra.mxu0 %v848
  %874 = vmatpush.msra.mxu0 %v847
  %875 = vmatpush.msra.mxu0 %v846
  %876 = vmatmul.f32.gmra.mxu0 %v855
  %v877 = vpop.f32.mrf.mxu0
  %v878 = vadd.f32 %v852, %v877
  %879 = vmatmul.f32.gmra.mxu0 %v858
  %v880 = vpop.f32.mrf.mxu0
  %v881 = vadd.f32 %v852, %v880
  %882 = vdwg.mxu0
  %v883 = vmax.f32 %v878, 0.0
  %v884 = vmax.f32 %v881, 0.0
  %v885 = vld [vmem:[%s19] sm:$0xff]
  %v886 = vld [vmem:[%s19 + $0x8] sm:$0xff]
  %v887 = vld [vmem:[%s19 + $0x10] sm:$0xff]
  %v888 = vld [vmem:[%s19 + $0x18] sm:$0xff]
  %v889 = vld [vmem:[%s19 + $0x20] sm:$0xff]
  %v890 = vld [vmem:[%s19 + $0x28] sm:$0xff]
  %v891 = vld [vmem:[%s19 + $0x30] sm:$0xff]
  %v892 = vld [vmem:[%s19 + $0x38] sm:$0xff]
  %v893 = vld [vmem:[%s20] sm:$0x1]
  %v895 = vperm.slane %v893, 0
  %vm897 = vcmask 523264
  %v899 = vsel %vm897, %v883, 0
  %v902 = vsel %vm897, %v884, 0
  %904 = vmatpush.msra.mxu0 0.0
  %905 = vmatpush.msra.mxu0 0.0
  %906 = vmatpush.msra.mxu0 0.0
  %907 = vmatpush.msra.mxu0 0.0
  %908 = vmatpush.msra.mxu0 0.0
  %909 = vmatpush.msra.mxu0 0.0
  %910 = vmatpush.msra.mxu0 0.0
  %911 = vmatpush.msra.mxu0 0.0
  %912 = vmatpush.msra.mxu0 %v892
  %913 = vmatpush.msra.mxu0 %v891
  %914 = vmatpush.msra.mxu0 %v890
  %915 = vmatpush.msra.mxu0 %v889
  %916 = vmatpush.msra.mxu0 %v888
  %917 = vmatpush.msra.mxu0 %v887
  %918 = vmatpush.msra.mxu0 %v886
  %919 = vmatpush.msra.mxu0 %v885
  %920 = vmatmul.f32.gmra.mxu0 %v899
  %v921 = vpop.f32.mrf.mxu0
  %v922 = vadd.f32 %v895, %v921
  %923 = vmatmul.f32.gmra.mxu0 %v902
  %v924 = vpop.f32.mrf.mxu0
  %v925 = vadd.f32 %v895, %v924
  %926 = vdwg.mxu0
  %v927 = vadd.f32 %v844, %v922
  %v928 = vadd.f32 %v845, %v925
  %v929 = vld [vmem:[%s21] sm:$0x1]
  %v931 = vperm.slane %v929, 0
  %v933 = vmul.f32 %v927, %v931
  %v934 = vmul.f32 %v928, %v931
  %v935 = vld [vmem:[%s22] sm:$0x1]
  %v937 = vperm.slane %v935, 0
  %v939 = vadd.f32 %v933, %v937
  %v940 = vadd.f32 %v934, %v937
  %941 = vst.msk [vmem:[%s23] sm:$0xff] %vm179, %v939
  %942 = vst.msk [vmem:[%s23 + $0x8] sm:$0xff] %vm179, %v940
  // Predicated region
  $region94: #{gps_forward.5} parent=0 // pred_check
    _
  $region95: #{gps_forward.5} parent=0 // pred_check_branch
    %944 = sbr.rel (0) target = $region97
  $region96: #{gps_forward.5} parent=0 // pred_region
    _
  $region97: #{gps_forward.5} parent=0 // pred_fallthru
    _
  // Predicated region
  $region98: #{gps_forward.5} parent=0 // pred_check
    _
  $region99: #{gps_forward.5} parent=0 // pred_check_branch
    %946 = sbr.rel (0) target = $region101
  $region100: #{gps_forward.5} parent=0 // pred_region
    _
  $region101: #{gps_forward.5} parent=0 // pred_fallthru
    _

</llo_original>
